<compile_context>
chip_gen: v5e
topology: v5e:2x2
jax: 0.10.0
libtpu: 0.0.40
codegen_flags: <defaults>
</compile_context>

<pallas_src>
import jax
import jax.numpy as jnp
from jax.experimental import pallas as pl
from jax.experimental.pallas import tpu as pltpu

MATMUL_DTYPE = jnp.float32   # bf16 at production sizes (see header comment)


def make_fused_lstm_kernel(num_layers, T, BB, H):
    """Fused multi-layer LSTM + head kernel for static (num_layers, T, BB, H)."""

    def kernel(*refs):
        idx = 0
        x_ref = refs[idx]; idx += 1                    # (T*BB, I) time-major input block
        wih0_ref = refs[idx]; idx += 1                 # (I,  4H) layer-0 input weights
        whh0_ref = refs[idx]; idx += 1                 # (H,  4H) layer-0 recurrent weights
        b0_ref = refs[idx]; idx += 1                   # (1,  4H) layer-0 bias (f32)
        upper = []                                     # layers >= 1: (Wcat (2H,4H), bias)
        for _ in range(num_layers - 1):
            upper.append((refs[idx], refs[idx + 1])); idx += 2
        w_head_ref = refs[idx]; idx += 1               # (1, H)
        b_head_ref = refs[idx]; idx += 1               # (1, 1) in SMEM
        out_ref = refs[idx]; idx += 1                  # (BB, 1)
        gx_sc = refs[idx]                              # (T*BB, 4H) hoisted layer-0 gates

        # Hoisted layer-0 input projection + bias for ALL time steps: one MXU call,
        # off the serial recurrence path.
        gx_sc[...] = (
            jnp.dot(x_ref[...], wih0_ref[...], preferred_element_type=jnp.float32)
            + b0_ref[...]
        )

        # Hoisted gate-column mask: g (cell candidate) columns keep tanh; i/f/o columns
        # (pre-scaled by 0.5 in the wrapper) get sigmoid(z) = 0.5*(tanh(z/2)+1),
        # applied full-width so only one affine+select sits on the latency chain.
        col = jax.lax.broadcasted_iota(jnp.int32, (BB, 4 * H), 1)
        is_g = (col >= 2 * H) & (col < 3 * H)

        def cell(gates, c_prev):
            tg = jnp.tanh(gates)                               # single full-width EUP pass
            mixed = jnp.where(is_g, tg, 0.5 * (tg + 1.0))      # full-width affine+select
            i_g = mixed[:, 0 * H:1 * H]
            f_g = mixed[:, 1 * H:2 * H]
            g_g = mixed[:, 2 * H:3 * H]
            o_g = mixed[:, 3 * H:4 * H]
            c_new = f_g * c_prev + i_g * g_g
            h_new = o_g * jnp.tanh(c_new)
            return h_new, c_new

        zeros = jnp.zeros((BB, H), jnp.float32)
        h = [zeros] * num_layers
        c = [zeros] * num_layers

        # Wavefront over (time x layer): at step s, layer l processes t = s - l.
        # Updates within a step are mutually independent (they read only step-(s-1)
        # state), so MXU/EUP work of adjacent layers overlaps.  Critical path is
        # T + L - 1 cell updates instead of T*L.
        # NOTE: T is small & static here, so a full Python unroll is fine; for large T
        # convert the wavefront loop to lax.fori_loop(..., unroll=small) carrying
        # (h..., c...) to bound vreg live ranges.
        for s in range(T + num_layers - 1):
            h_new = list(h)
            c_new = list(c)
            for layer in range(num_layers):
                t = s - layer
                if t < 0 or t >= T:
                    continue
                if layer == 0:
                    gates = gx_sc[t * BB:(t + 1) * BB, :] + jnp.dot(
                        h[0].astype(whh0_ref.dtype), whh0_ref[...],
                        preferred_element_type=jnp.float32)
                else:
                    wcat_ref, b_ref = upper[layer - 1]
                    # Fused input+recurrent projection: one (BB,2H)@(2H,4H) dot.
                    hin = jnp.concatenate([h[layer - 1], h[layer]], axis=1)
                    gates = jnp.dot(
                        hin.astype(wcat_ref.dtype), wcat_ref[...],
                        preferred_element_type=jnp.float32) + b_ref[...]
                h_new[layer], c_new[layer] = cell(gates, c[layer])
            h, c = h_new, c_new

        # Fused head: Linear(H -> 1) + sigmoid as a VPU multiply + lane reduction
        # (an N=1 MXU matmul would waste 127/128 columns).  Bias read from SMEM.
        y = jnp.sum(h[num_layers - 1] * w_head_ref[...], axis=-1, keepdims=True)
        y = y + b_head_ref[0, 0]
        out_ref[...] = (0.5 * (jnp.tanh(0.5 * y) + 1.0)).astype(out_ref.dtype)

    return kernel


def _prep_layer_weights(w_ih, w_hh, b_ih, b_hh):
    """PyTorch (4H,in)/(4H,H)/(4H,) -> transposed, bias-folded, gate-scaled tensors."""
    H = w_ih.shape[0] // 4
    # Pre-scale i/f/o gate columns by 0.5 so sigmoid comes out of a single tanh pass.
    scale = jnp.concatenate([
        jnp.full((H,), 0.5, jnp.float32),   # i
        jnp.full((H,), 0.5, jnp.float32),   # f
        jnp.ones((H,), jnp.float32),        # g (true tanh gate, unscaled)
        jnp.full((H,), 0.5, jnp.float32),   # o
    ])
    wih_t = (w_ih.T.astype(jnp.float32) * scale[None, :]).astype(MATMUL_DTYPE)
    whh_t = (w_hh.T.astype(jnp.float32) * scale[None, :]).astype(MATMUL_DTYPE)
    b_row = ((b_ih + b_hh).astype(jnp.float32) * scale)[None, :]   # (1, 4H), f32
    return wih_t, whh_t, b_row


def my_lstm_forward(params, x_bti, *, batch_block=None):
    """x_bti: (B, T, I) batch_first, like the PyTorch module. Returns (B, 1)."""
    B, T, I = x_bti.shape
    num_layers = len(params["lstm"])
    H = params["lstm"][0][1].shape[1]

    # Batch-block grid axis: independent batch slices of the recurrence, marked
    # "parallel" so a v7x megacore can shard them across its two TensorCores.
    if batch_block is None or batch_block >= B:
        batch_block = B
    assert B % batch_block == 0
    BB = batch_block
    nb = B // BB

    # Time-major, batch-blocked, flattened: block b holds rows (t, b*BB:(b+1)*BB, :)
    # stacked over t, so the hoisted layer-0 projection is one (T*BB, I) matmul.
    # TODO(synk): at production sizes fold this transpose into the kernel's own DMA
    # (grid over T or a strided make_async_copy) instead of a standalone XLA op.
    x_tbi = jnp.transpose(x_bti, (1, 0, 2)).astype(MATMUL_DTYPE)          # (T, B, I)
    x_blk = (x_tbi.reshape(T, nb, BB, I)
                  .transpose(1, 0, 2, 3)
                  .reshape(nb, T * BB, I))                                 # (nb, T*BB, I)

    args = [x_blk]
    in_specs = [pl.BlockSpec((None, T * BB, I), lambda b: (b, 0, 0))]

    # Layer 0: separate W_ih (hoisted projection) and W_hh (per-step recurrent dot).
    w_ih0, w_hh0, b_ih0, b_hh0 = params["lstm"][0]
    wih0, whh0, b0 = _prep_layer_weights(w_ih0, w_hh0, b_ih0, b_hh0)
    args += [wih0, whh0, b0]
    in_specs += [pl.BlockSpec(wih0.shape, lambda b: (0, 0)),
                 pl.BlockSpec(whh0.shape, lambda b: (0, 0)),
                 pl.BlockSpec(b0.shape, lambda b: (0, 0))]

    # Layers >= 1: fuse W_ih and W_hh into one (2H, 4H) matrix for the per-step dot.
    for (w_ih, w_hh, b_ih, b_hh) in params["lstm"][1:]:
        wih_t, whh_t, b_row = _prep_layer_weights(w_ih, w_hh, b_ih, b_hh)
        wcat = jnp.concatenate([wih_t, whh_t], axis=0)                     # (2H, 4H)
        args += [wcat, b_row]
        in_specs += [pl.BlockSpec(wcat.shape, lambda b: (0, 0)),
                     pl.BlockSpec(b_row.shape, lambda b: (0, 0))]

    w_head = params["linear_w"].astype(jnp.float32)                        # (1, H)
    b_head = params["linear_b"].reshape(1, 1).astype(jnp.float32)          # (1, 1)
    args += [w_head, b_head]
    in_specs += [pl.BlockSpec(w_head.shape, lambda b: (0, 0)),
                 pl.BlockSpec(memory_space=pltpu.MemorySpace.SMEM)]        # scalar bias

    kernel = make_fused_lstm_kernel(num_layers, T, BB, H)
    return pl.pallas_call(
        kernel,
        out_shape=jax.ShapeDtypeStruct((B, 1), jnp.float32),
        grid=(nb,),
        in_specs=in_specs,
        out_specs=pl.BlockSpec((BB, 1), lambda b: (b, 0)),
        scratch_shapes=[
            pltpu.VMEM((T * BB, 4 * H), jnp.float32),   # hoisted layer-0 gates_x
        ],
        compiler_params=pltpu.CompilerParams(
            dimension_semantics=("parallel",),
            vmem_limit_bytes=32 * 1024 * 1024),
    )(*args)


def init_params(key, input_size, hidden_size, num_layers):
    """Deterministic init matching PyTorch's uniform(-1/sqrt(H), 1/sqrt(H)) shapes."""
    bound = 1.0 / jnp.sqrt(jnp.float32(hidden_size))
    params = {"lstm": []}
    for layer in range(num_layers):
        in_sz = input_size if layer == 0 else hidden_size
        key, k1, k2, k3, k4 = jax.random.split(key, 5)
        w_ih = jax.random.uniform(k1, (4 * hidden_size, in_sz), jnp.float32, -bound, bound)
        w_hh = jax.random.uniform(k2, (4 * hidden_size, hidden_size), jnp.float32, -bound, bound)
        b_ih = jax.random.uniform(k3, (4 * hidden_size,), jnp.float32, -bound, bound)
        b_hh = jax.random.uniform(k4, (4 * hidden_size,), jnp.float32, -bound, bound)
        params["lstm"].append((w_ih, w_hh, b_ih, b_hh))
    key, k5, k6 = jax.random.split(key, 3)
    lin_bound = 1.0 / jnp.sqrt(jnp.float32(hidden_size))
    params["linear_w"] = jax.random.uniform(k5, (1, hidden_size), jnp.float32, -lin_bound, lin_bound)
    params["linear_b"] = jax.random.uniform(k6, (1,), jnp.float32, -lin_bound, lin_bound)
    return params


def reference_forward(params, x_bti):
    """Pure-JAX reference of the same math (PyTorch LSTM semantics, gate order i,f,g,o)."""
    B = x_bti.shape[0]
    seq = jnp.transpose(x_bti, (1, 0, 2)).astype(jnp.float32)
    for (w_ih, w_hh, b_ih, b_hh) in params["lstm"]:
        H = w_hh.shape[1]
        h = jnp.zeros((B, H), jnp.float32)
        c = jnp.zeros((B, H), jnp.float32)
        outs = []
        for t in range(seq.shape[0]):
            gates = seq[t] @ w_ih.T + h @ w_hh.T + b_ih + b_hh
            i_g = jax.nn.sigmoid(gates[:, 0 * H:1 * H])
            f_g = jax.nn.sigmoid(gates[:, 1 * H:2 * H])
            g_g = jnp.tanh(gates[:, 2 * H:3 * H])
            o_g = jax.nn.sigmoid(gates[:, 3 * H:4 * H])
            c = f_g * c + i_g * g_g
            h = o_g * jnp.tanh(c)
            outs.append(h)
        seq = jnp.stack(outs, axis=0)
    hn_last = seq[-1]
    return jax.nn.sigmoid(hn_last @ params["linear_w"].T + params["linear_b"])


if __name__ == "__main__":
    input_size = 16
    hidden_size = 32
    num_layers = 2
    batch = 8
    seq_len = 8

    key = jax.random.PRNGKey(0)
    key, kx = jax.random.split(key)
    x = jax.random.normal(kx, (batch, seq_len, input_size), jnp.float32)

    params = init_params(key, input_size, hidden_size, num_layers)

    out = my_lstm_forward(params, x)
    out = jax.block_until_ready(out)

    ref = jax.block_until_ready(reference_forward(params, x))
    assert out.shape == (batch, 1)
    assert jnp.max(jnp.abs(out - ref)) < 2e-4

    print("KERNEL_OK")
</pallas_src>

<mosaic_0001>
module attributes {stable_mosaic.version = 11 : i64} {
  func.func @kernel(%arg0: i32, %arg1: memref<1x64x16xf32, #tpu.memory_space<vmem>>, %arg2: memref<16x128xf32, #tpu.memory_space<vmem>>, %arg3: memref<32x128xf32, #tpu.memory_space<vmem>>, %arg4: memref<1x128xf32, #tpu.memory_space<vmem>>, %arg5: memref<64x128xf32, #tpu.memory_space<vmem>>, %arg6: memref<1x128xf32, #tpu.memory_space<vmem>>, %arg7: memref<1x32xf32, #tpu.memory_space<vmem>>, %arg8: memref<1x1xf32, #tpu.memory_space<smem>>, %arg9: memref<8x1xf32, #tpu.memory_space<vmem>>, %arg10: memref<64x128xf32, #tpu.memory_space<vmem>>) attributes {dimension_semantics = [#tpu.dimension_semantics<parallel>], iteration_bounds = array<i64: 1>, scalar_prefetch = 0 : i64, scratch_operands = 1 : i64, tpu.core_type = #tpu.core_type<tc>, window_params = [{transform_indices = @transform_0, window_bounds = array<i64: 1, 64, 16>}, {pipeline_mode = #tpu.pipeline_mode<synchronous>, transform_indices = @transform_1, window_bounds = array<i64: 16, 128>}, {pipeline_mode = #tpu.pipeline_mode<synchronous>, transform_indices = @transform_2, window_bounds = array<i64: 32, 128>}, {pipeline_mode = #tpu.pipeline_mode<synchronous>, transform_indices = @transform_3, window_bounds = array<i64: 1, 128>}, {pipeline_mode = #tpu.pipeline_mode<synchronous>, transform_indices = @transform_4, window_bounds = array<i64: 64, 128>}, {pipeline_mode = #tpu.pipeline_mode<synchronous>, transform_indices = @transform_5, window_bounds = array<i64: 1, 128>}, {pipeline_mode = #tpu.pipeline_mode<synchronous>, transform_indices = @transform_6, window_bounds = array<i64: 1, 32>}, {transform_indices = @transform_7, window_bounds = array<i64: 1, 1>}, {transform_indices = @transform_8, window_bounds = array<i64: 8, 1>}]} {
    %c0 = arith.constant 0 : index
    %c0_0 = arith.constant 0 : index
    %c0_1 = arith.constant 0 : index
    %0 = vector.load %arg1[%c0, %c0_0, %c0_1] : memref<1x64x16xf32, #tpu.memory_space<vmem>>, vector<1x64x16xf32>
    %1 = vector.shape_cast %0 : vector<1x64x16xf32> to vector<64x16xf32>
    %c0_2 = arith.constant 0 : index
    %c0_3 = arith.constant 0 : index
    %2 = vector.load %arg2[%c0_2, %c0_3] : memref<16x128xf32, #tpu.memory_space<vmem>>, vector<16x128xf32>
    %cst = arith.constant dense<0.000000e+00> : vector<64x128xf32>
    %3 = tpu.matmul %1, %2, %cst {dimension_numbers = #tpu.dot_dimension_numbers<[1], [0], [0], [1], [0, 0, 1, 1], [], []>} : vector<64x16xf32>, vector<16x128xf32>, vector<64x128xf32> -> vector<64x128xf32>
    %c0_4 = arith.constant 0 : index
    %c0_5 = arith.constant 0 : index
    %4 = vector.load %arg4[%c0_4, %c0_5] : memref<1x128xf32, #tpu.memory_space<vmem>>, vector<1x128xf32>
    %5 = vector.broadcast %4 : vector<1x128xf32> to vector<64x128xf32>
    %6 = arith.addf %3, %5 : vector<64x128xf32>
    %c0_6 = arith.constant 0 : index
    %c0_7 = arith.constant 0 : index
    %7 = vector.load %arg10[%c0_6, %c0_7] : memref<64x128xf32, #tpu.memory_space<vmem>>, vector<64x128xf32>
    tpu.vector_store %arg10[%c0_6, %c0_7], %6 {strides = array<i32>} : memref<64x128xf32, #tpu.memory_space<vmem>>, vector<64x128xf32>,
    %8 = tpu.iota {dimensions = array<i32: 1>} : vector<8x128xi32>
    %c64_i32 = arith.constant 64 : i32
    %9 = vector.broadcast %c64_i32 : i32 to vector<8x128xi32>
    %10 = arith.cmpi sge, %8, %9 : vector<8x128xi32>
    %c96_i32 = arith.constant 96 : i32
    %11 = vector.broadcast %c96_i32 : i32 to vector<8x128xi32>
    %12 = arith.cmpi slt, %8, %11 : vector<8x128xi32>
    %13 = arith.andi %10, %12 : vector<8x128xi1>
    %cst_8 = arith.constant 0.000000e+00 : f32
    %14 = vector.broadcast %cst_8 : f32 to vector<8x32xf32>
    %c0_9 = arith.constant 0 : index
    %c0_10 = arith.constant 0 : index
    %15 = vector.load %arg10[%c0_9, %c0_10] : memref<64x128xf32, #tpu.memory_space<vmem>>, vector<8x128xf32>
    %c0_11 = arith.constant 0 : index
    %c0_12 = arith.constant 0 : index
    %16 = vector.load %arg3[%c0_11, %c0_12] : memref<32x128xf32, #tpu.memory_space<vmem>>, vector<32x128xf32>
    %cst_13 = arith.constant dense<0.000000e+00> : vector<8x128xf32>
    %17 = tpu.matmul %14, %16, %cst_13 {dimension_numbers = #tpu.dot_dimension_numbers<[1], [0], [0], [1], [0, 0, 1, 1], [], []>} : vector<8x32xf32>, vector<32x128xf32>, vector<8x128xf32> -> vector<8x128xf32>
    %18 = arith.addf %15, %17 : vector<8x128xf32>
    %19 = math.tanh %18 : vector<8x128xf32>
    %cst_14 = arith.constant 1.000000e+00 : f32
    %20 = vector.broadcast %cst_14 : f32 to vector<8x128xf32>
    %21 = arith.addf %19, %20 : vector<8x128xf32>
    %cst_15 = arith.constant 5.000000e-01 : f32
    %22 = vector.broadcast %cst_15 : f32 to vector<8x128xf32>
    %23 = arith.mulf %22, %21 : vector<8x128xf32>
    %24 = arith.select %13, %19, %23 : vector<8x128xi1>, vector<8x128xf32>
    %25 = vector.extract_strided_slice %24 {offsets = [0, 0], sizes = [8, 32], strides = [1, 1]} : vector<8x128xf32> to vector<8x32xf32>
    %26 = vector.extract_strided_slice %24 {offsets = [0, 32], sizes = [8, 32], strides = [1, 1]} : vector<8x128xf32> to vector<8x32xf32>
    %27 = vector.extract_strided_slice %24 {offsets = [0, 64], sizes = [8, 32], strides = [1, 1]} : vector<8x128xf32> to vector<8x32xf32>
    %28 = vector.extract_strided_slice %24 {offsets = [0, 96], sizes = [8, 32], strides = [1, 1]} : vector<8x128xf32> to vector<8x32xf32>
    %29 = arith.mulf %26, %14 : vector<8x32xf32>
    %30 = arith.mulf %25, %27 : vector<8x32xf32>
    %31 = arith.addf %29, %30 : vector<8x32xf32>
    %32 = math.tanh %31 : vector<8x32xf32>
    %33 = arith.mulf %28, %32 : vector<8x32xf32>
    %c8 = arith.constant 8 : index
    %c0_16 = arith.constant 0 : index
    %34 = vector.load %arg10[%c8, %c0_16] : memref<64x128xf32, #tpu.memory_space<vmem>>, vector<8x128xf32>
    %c0_17 = arith.constant 0 : index
    %c0_18 = arith.constant 0 : index
    %35 = vector.load %arg3[%c0_17, %c0_18] : memref<32x128xf32, #tpu.memory_space<vmem>>, vector<32x128xf32>
    %cst_19 = arith.constant dense<0.000000e+00> : vector<8x128xf32>
    %36 = tpu.matmul %33, %35, %cst_19 {dimension_numbers = #tpu.dot_dimension_numbers<[1], [0], [0], [1], [0, 0, 1, 1], [], []>} : vector<8x32xf32>, vector<32x128xf32>, vector<8x128xf32> -> vector<8x128xf32>
    %37 = arith.addf %34, %36 : vector<8x128xf32>
    %38 = math.tanh %37 : vector<8x128xf32>
    %cst_20 = arith.constant 1.000000e+00 : f32
    %39 = vector.broadcast %cst_20 : f32 to vector<8x128xf32>
    %40 = arith.addf %38, %39 : vector<8x128xf32>
    %cst_21 = arith.constant 5.000000e-01 : f32
    %41 = vector.broadcast %cst_21 : f32 to vector<8x128xf32>
    %42 = arith.mulf %41, %40 : vector<8x128xf32>
    %43 = arith.select %13, %38, %42 : vector<8x128xi1>, vector<8x128xf32>
    %44 = vector.extract_strided_slice %43 {offsets = [0, 0], sizes = [8, 32], strides = [1, 1]} : vector<8x128xf32> to vector<8x32xf32>
    %45 = vector.extract_strided_slice %43 {offsets = [0, 32], sizes = [8, 32], strides = [1, 1]} : vector<8x128xf32> to vector<8x32xf32>
    %46 = vector.extract_strided_slice %43 {offsets = [0, 64], sizes = [8, 32], strides = [1, 1]} : vector<8x128xf32> to vector<8x32xf32>
    %47 = vector.extract_strided_slice %43 {offsets = [0, 96], sizes = [8, 32], strides = [1, 1]} : vector<8x128xf32> to vector<8x32xf32>
    %48 = arith.mulf %45, %31 : vector<8x32xf32>
    %49 = arith.mulf %44, %46 : vector<8x32xf32>
    %50 = arith.addf %48, %49 : vector<8x32xf32>
    %51 = math.tanh %50 : vector<8x32xf32>
    %52 = arith.mulf %47, %51 : vector<8x32xf32>
    %53 = tpu.concatenate %33, %14 in 1 : vector<8x32xf32>, vector<8x32xf32> -> vector<8x64xf32>
    %c0_22 = arith.constant 0 : index
    %c0_23 = arith.constant 0 : index
    %54 = vector.load %arg5[%c0_22, %c0_23] : memref<64x128xf32, #tpu.memory_space<vmem>>, vector<64x128xf32>
    %cst_24 = arith.constant dense<0.000000e+00> : vector<8x128xf32>
    %55 = tpu.matmul %53, %54, %cst_24 {dimension_numbers = #tpu.dot_dimension_numbers<[1], [0], [0], [1], [0, 0, 1, 1], [], []>} : vector<8x64xf32>, vector<64x128xf32>, vector<8x128xf32> -> vector<8x128xf32>
    %c0_25 = arith.constant 0 : index
    %c0_26 = arith.constant 0 : index
    %56 = vector.load %arg6[%c0_25, %c0_26] : memref<1x128xf32, #tpu.memory_space<vmem>>, vector<1x128xf32>
    %57 = vector.broadcast %56 : vector<1x128xf32> to vector<8x128xf32>
    %58 = arith.addf %55, %57 : vector<8x128xf32>
    %59 = math.tanh %58 : vector<8x128xf32>
    %cst_27 = arith.constant 1.000000e+00 : f32
    %60 = vector.broadcast %cst_27 : f32 to vector<8x128xf32>
    %61 = arith.addf %59, %60 : vector<8x128xf32>
    %cst_28 = arith.constant 5.000000e-01 : f32
    %62 = vector.broadcast %cst_28 : f32 to vector<8x128xf32>
    %63 = arith.mulf %62, %61 : vector<8x128xf32>
    %64 = arith.select %13, %59, %63 : vector<8x128xi1>, vector<8x128xf32>
    %65 = vector.extract_strided_slice %64 {offsets = [0, 0], sizes = [8, 32], strides = [1, 1]} : vector<8x128xf32> to vector<8x32xf32>
    %66 = vector.extract_strided_slice %64 {offsets = [0, 32], sizes = [8, 32], strides = [1, 1]} : vector<8x128xf32> to vector<8x32xf32>
    %67 = vector.extract_strided_slice %64 {offsets = [0, 64], sizes = [8, 32], strides = [1, 1]} : vector<8x128xf32> to vector<8x32xf32>
    %68 = vector.extract_strided_slice %64 {offsets = [0, 96], sizes = [8, 32], strides = [1, 1]} : vector<8x128xf32> to vector<8x32xf32>
    %69 = arith.mulf %66, %14 : vector<8x32xf32>
    %70 = arith.mulf %65, %67 : vector<8x32xf32>
    %71 = arith.addf %69, %70 : vector<8x32xf32>
    %72 = math.tanh %71 : vector<8x32xf32>
    %73 = arith.mulf %68, %72 : vector<8x32xf32>
    %c16 = arith.constant 16 : index
    %c0_29 = arith.constant 0 : index
    %74 = vector.load %arg10[%c16, %c0_29] : memref<64x128xf32, #tpu.memory_space<vmem>>, vector<8x128xf32>
    %c0_30 = arith.constant 0 : index
    %c0_31 = arith.constant 0 : index
    %75 = vector.load %arg3[%c0_30, %c0_31] : memref<32x128xf32, #tpu.memory_space<vmem>>, vector<32x128xf32>
    %cst_32 = arith.constant dense<0.000000e+00> : vector<8x128xf32>
    %76 = tpu.matmul %52, %75, %cst_32 {dimension_numbers = #tpu.dot_dimension_numbers<[1], [0], [0], [1], [0, 0, 1, 1], [], []>} : vector<8x32xf32>, vector<32x128xf32>, vector<8x128xf32> -> vector<8x128xf32>
    %77 = arith.addf %74, %76 : vector<8x128xf32>
    %78 = math.tanh %77 : vector<8x128xf32>
    %cst_33 = arith.constant 1.000000e+00 : f32
    %79 = vector.broadcast %cst_33 : f32 to vector<8x128xf32>
    %80 = arith.addf %78, %79 : vector<8x128xf32>
    %cst_34 = arith.constant 5.000000e-01 : f32
    %81 = vector.broadcast %cst_34 : f32 to vector<8x128xf32>
    %82 = arith.mulf %81, %80 : vector<8x128xf32>
    %83 = arith.select %13, %78, %82 : vector<8x128xi1>, vector<8x128xf32>
    %84 = vector.extract_strided_slice %83 {offsets = [0, 0], sizes = [8, 32], strides = [1, 1]} : vector<8x128xf32> to vector<8x32xf32>
    %85 = vector.extract_strided_slice %83 {offsets = [0, 32], sizes = [8, 32], strides = [1, 1]} : vector<8x128xf32> to vector<8x32xf32>
    %86 = vector.extract_strided_slice %83 {offsets = [0, 64], sizes = [8, 32], strides = [1, 1]} : vector<8x128xf32> to vector<8x32xf32>
    %87 = vector.extract_strided_slice %83 {offsets = [0, 96], sizes = [8, 32], strides = [1, 1]} : vector<8x128xf32> to vector<8x32xf32>
    %88 = arith.mulf %85, %50 : vector<8x32xf32>
    %89 = arith.mulf %84, %86 : vector<8x32xf32>
    %90 = arith.addf %88, %89 : vector<8x32xf32>
    %91 = math.tanh %90 : vector<8x32xf32>
    %92 = arith.mulf %87, %91 : vector<8x32xf32>
    %93 = tpu.concatenate %52, %73 in 1 : vector<8x32xf32>, vector<8x32xf32> -> vector<8x64xf32>
    %c0_35 = arith.constant 0 : index
    %c0_36 = arith.constant 0 : index
    %94 = vector.load %arg5[%c0_35, %c0_36] : memref<64x128xf32, #tpu.memory_space<vmem>>, vector<64x128xf32>
    %cst_37 = arith.constant dense<0.000000e+00> : vector<8x128xf32>
    %95 = tpu.matmul %93, %94, %cst_37 {dimension_numbers = #tpu.dot_dimension_numbers<[1], [0], [0], [1], [0, 0, 1, 1], [], []>} : vector<8x64xf32>, vector<64x128xf32>, vector<8x128xf32> -> vector<8x128xf32>
    %c0_38 = arith.constant 0 : index
    %c0_39 = arith.constant 0 : index
    %96 = vector.load %arg6[%c0_38, %c0_39] : memref<1x128xf32, #tpu.memory_space<vmem>>, vector<1x128xf32>
    %97 = vector.broadcast %96 : vector<1x128xf32> to vector<8x128xf32>
    %98 = arith.addf %95, %97 : vector<8x128xf32>
    %99 = math.tanh %98 : vector<8x128xf32>
    %cst_40 = arith.constant 1.000000e+00 : f32
    %100 = vector.broadcast %cst_40 : f32 to vector<8x128xf32>
    %101 = arith.addf %99, %100 : vector<8x128xf32>
    %cst_41 = arith.constant 5.000000e-01 : f32
    %102 = vector.broadcast %cst_41 : f32 to vector<8x128xf32>
    %103 = arith.mulf %102, %101 : vector<8x128xf32>
    %104 = arith.select %13, %99, %103 : vector<8x128xi1>, vector<8x128xf32>
    %105 = vector.extract_strided_slice %104 {offsets = [0, 0], sizes = [8, 32], strides = [1, 1]} : vector<8x128xf32> to vector<8x32xf32>
    %106 = vector.extract_strided_slice %104 {offsets = [0, 32], sizes = [8, 32], strides = [1, 1]} : vector<8x128xf32> to vector<8x32xf32>
    %107 = vector.extract_strided_slice %104 {offsets = [0, 64], sizes = [8, 32], strides = [1, 1]} : vector<8x128xf32> to vector<8x32xf32>
    %108 = vector.extract_strided_slice %104 {offsets = [0, 96], sizes = [8, 32], strides = [1, 1]} : vector<8x128xf32> to vector<8x32xf32>
    %109 = arith.mulf %106, %71 : vector<8x32xf32>
    %110 = arith.mulf %105, %107 : vector<8x32xf32>
    %111 = arith.addf %109, %110 : vector<8x32xf32>
    %112 = math.tanh %111 : vector<8x32xf32>
    %113 = arith.mulf %108, %112 : vector<8x32xf32>
    %c24 = arith.constant 24 : index
    %c0_42 = arith.constant 0 : index
    %114 = vector.load %arg10[%c24, %c0_42] : memref<64x128xf32, #tpu.memory_space<vmem>>, vector<8x128xf32>
    %c0_43 = arith.constant 0 : index
    %c0_44 = arith.constant 0 : index
    %115 = vector.load %arg3[%c0_43, %c0_44] : memref<32x128xf32, #tpu.memory_space<vmem>>, vector<32x128xf32>
    %cst_45 = arith.constant dense<0.000000e+00> : vector<8x128xf32>
    %116 = tpu.matmul %92, %115, %cst_45 {dimension_numbers = #tpu.dot_dimension_numbers<[1], [0], [0], [1], [0, 0, 1, 1], [], []>} : vector<8x32xf32>, vector<32x128xf32>, vector<8x128xf32> -> vector<8x128xf32>
    %117 = arith.addf %114, %116 : vector<8x128xf32>
    %118 = math.tanh %117 : vector<8x128xf32>
    %cst_46 = arith.constant 1.000000e+00 : f32
    %119 = vector.broadcast %cst_46 : f32 to vector<8x128xf32>
    %120 = arith.addf %118, %119 : vector<8x128xf32>
    %cst_47 = arith.constant 5.000000e-01 : f32
    %121 = vector.broadcast %cst_47 : f32 to vector<8x128xf32>
    %122 = arith.mulf %121, %120 : vector<8x128xf32>
    %123 = arith.select %13, %118, %122 : vector<8x128xi1>, vector<8x128xf32>
    %124 = vector.extract_strided_slice %123 {offsets = [0, 0], sizes = [8, 32], strides = [1, 1]} : vector<8x128xf32> to vector<8x32xf32>
    %125 = vector.extract_strided_slice %123 {offsets = [0, 32], sizes = [8, 32], strides = [1, 1]} : vector<8x128xf32> to vector<8x32xf32>
    %126 = vector.extract_strided_slice %123 {offsets = [0, 64], sizes = [8, 32], strides = [1, 1]} : vector<8x128xf32> to vector<8x32xf32>
    %127 = vector.extract_strided_slice %123 {offsets = [0, 96], sizes = [8, 32], strides = [1, 1]} : vector<8x128xf32> to vector<8x32xf32>
    %128 = arith.mulf %125, %90 : vector<8x32xf32>
    %129 = arith.mulf %124, %126 : vector<8x32xf32>
    %130 = arith.addf %128, %129 : vector<8x32xf32>
    %131 = math.tanh %130 : vector<8x32xf32>
    %132 = arith.mulf %127, %131 : vector<8x32xf32>
    %133 = tpu.concatenate %92, %113 in 1 : vector<8x32xf32>, vector<8x32xf32> -> vector<8x64xf32>
    %c0_48 = arith.constant 0 : index
    %c0_49 = arith.constant 0 : index
    %134 = vector.load %arg5[%c0_48, %c0_49] : memref<64x128xf32, #tpu.memory_space<vmem>>, vector<64x128xf32>
    %cst_50 = arith.constant dense<0.000000e+00> : vector<8x128xf32>
    %135 = tpu.matmul %133, %134, %cst_50 {dimension_numbers = #tpu.dot_dimension_numbers<[1], [0], [0], [1], [0, 0, 1, 1], [], []>} : vector<8x64xf32>, vector<64x128xf32>, vector<8x128xf32> -> vector<8x128xf32>
    %c0_51 = arith.constant 0 : index
    %c0_52 = arith.constant 0 : index
    %136 = vector.load %arg6[%c0_51, %c0_52] : memref<1x128xf32, #tpu.memory_space<vmem>>, vector<1x128xf32>
    %137 = vector.broadcast %136 : vector<1x128xf32> to vector<8x128xf32>
    %138 = arith.addf %135, %137 : vector<8x128xf32>
    %139 = math.tanh %138 : vector<8x128xf32>
    %cst_53 = arith.constant 1.000000e+00 : f32
    %140 = vector.broadcast %cst_53 : f32 to vector<8x128xf32>
    %141 = arith.addf %139, %140 : vector<8x128xf32>
    %cst_54 = arith.constant 5.000000e-01 : f32
    %142 = vector.broadcast %cst_54 : f32 to vector<8x128xf32>
    %143 = arith.mulf %142, %141 : vector<8x128xf32>
    %144 = arith.select %13, %139, %143 : vector<8x128xi1>, vector<8x128xf32>
    %145 = vector.extract_strided_slice %144 {offsets = [0, 0], sizes = [8, 32], strides = [1, 1]} : vector<8x128xf32> to vector<8x32xf32>
    %146 = vector.extract_strided_slice %144 {offsets = [0, 32], sizes = [8, 32], strides = [1, 1]} : vector<8x128xf32> to vector<8x32xf32>
    %147 = vector.extract_strided_slice %144 {offsets = [0, 64], sizes = [8, 32], strides = [1, 1]} : vector<8x128xf32> to vector<8x32xf32>
    %148 = vector.extract_strided_slice %144 {offsets = [0, 96], sizes = [8, 32], strides = [1, 1]} : vector<8x128xf32> to vector<8x32xf32>
    %149 = arith.mulf %146, %111 : vector<8x32xf32>
    %150 = arith.mulf %145, %147 : vector<8x32xf32>
    %151 = arith.addf %149, %150 : vector<8x32xf32>
    %152 = math.tanh %151 : vector<8x32xf32>
    %153 = arith.mulf %148, %152 : vector<8x32xf32>
    %c32 = arith.constant 32 : index
    %c0_55 = arith.constant 0 : index
    %154 = vector.load %arg10[%c32, %c0_55] : memref<64x128xf32, #tpu.memory_space<vmem>>, vector<8x128xf32>
    %c0_56 = arith.constant 0 : index
    %c0_57 = arith.constant 0 : index
    %155 = vector.load %arg3[%c0_56, %c0_57] : memref<32x128xf32, #tpu.memory_space<vmem>>, vector<32x128xf32>
    %cst_58 = arith.constant dense<0.000000e+00> : vector<8x128xf32>
    %156 = tpu.matmul %132, %155, %cst_58 {dimension_numbers = #tpu.dot_dimension_numbers<[1], [0], [0], [1], [0, 0, 1, 1], [], []>} : vector<8x32xf32>, vector<32x128xf32>, vector<8x128xf32> -> vector<8x128xf32>
    %157 = arith.addf %154, %156 : vector<8x128xf32>
    %158 = math.tanh %157 : vector<8x128xf32>
    %cst_59 = arith.constant 1.000000e+00 : f32
    %159 = vector.broadcast %cst_59 : f32 to vector<8x128xf32>
    %160 = arith.addf %158, %159 : vector<8x128xf32>
    %cst_60 = arith.constant 5.000000e-01 : f32
    %161 = vector.broadcast %cst_60 : f32 to vector<8x128xf32>
    %162 = arith.mulf %161, %160 : vector<8x128xf32>
    %163 = arith.select %13, %158, %162 : vector<8x128xi1>, vector<8x128xf32>
    %164 = vector.extract_strided_slice %163 {offsets = [0, 0], sizes = [8, 32], strides = [1, 1]} : vector<8x128xf32> to vector<8x32xf32>
    %165 = vector.extract_strided_slice %163 {offsets = [0, 32], sizes = [8, 32], strides = [1, 1]} : vector<8x128xf32> to vector<8x32xf32>
    %166 = vector.extract_strided_slice %163 {offsets = [0, 64], sizes = [8, 32], strides = [1, 1]} : vector<8x128xf32> to vector<8x32xf32>
    %167 = vector.extract_strided_slice %163 {offsets = [0, 96], sizes = [8, 32], strides = [1, 1]} : vector<8x128xf32> to vector<8x32xf32>
    %168 = arith.mulf %165, %130 : vector<8x32xf32>
    %169 = arith.mulf %164, %166 : vector<8x32xf32>
    %170 = arith.addf %168, %169 : vector<8x32xf32>
    %171 = math.tanh %170 : vector<8x32xf32>
    %172 = arith.mulf %167, %171 : vector<8x32xf32>
    %173 = tpu.concatenate %132, %153 in 1 : vector<8x32xf32>, vector<8x32xf32> -> vector<8x64xf32>
    %c0_61 = arith.constant 0 : index
    %c0_62 = arith.constant 0 : index
    %174 = vector.load %arg5[%c0_61, %c0_62] : memref<64x128xf32, #tpu.memory_space<vmem>>, vector<64x128xf32>
    %cst_63 = arith.constant dense<0.000000e+00> : vector<8x128xf32>
    %175 = tpu.matmul %173, %174, %cst_63 {dimension_numbers = #tpu.dot_dimension_numbers<[1], [0], [0], [1], [0, 0, 1, 1], [], []>} : vector<8x64xf32>, vector<64x128xf32>, vector<8x128xf32> -> vector<8x128xf32>
    %c0_64 = arith.constant 0 : index
    %c0_65 = arith.constant 0 : index
    %176 = vector.load %arg6[%c0_64, %c0_65] : memref<1x128xf32, #tpu.memory_space<vmem>>, vector<1x128xf32>
    %177 = vector.broadcast %176 : vector<1x128xf32> to vector<8x128xf32>
    %178 = arith.addf %175, %177 : vector<8x128xf32>
    %179 = math.tanh %178 : vector<8x128xf32>
    %cst_66 = arith.constant 1.000000e+00 : f32
    %180 = vector.broadcast %cst_66 : f32 to vector<8x128xf32>
    %181 = arith.addf %179, %180 : vector<8x128xf32>
    %cst_67 = arith.constant 5.000000e-01 : f32
    %182 = vector.broadcast %cst_67 : f32 to vector<8x128xf32>
    %183 = arith.mulf %182, %181 : vector<8x128xf32>
    %184 = arith.select %13, %179, %183 : vector<8x128xi1>, vector<8x128xf32>
    %185 = vector.extract_strided_slice %184 {offsets = [0, 0], sizes = [8, 32], strides = [1, 1]} : vector<8x128xf32> to vector<8x32xf32>
    %186 = vector.extract_strided_slice %184 {offsets = [0, 32], sizes = [8, 32], strides = [1, 1]} : vector<8x128xf32> to vector<8x32xf32>
    %187 = vector.extract_strided_slice %184 {offsets = [0, 64], sizes = [8, 32], strides = [1, 1]} : vector<8x128xf32> to vector<8x32xf32>
    %188 = vector.extract_strided_slice %184 {offsets = [0, 96], sizes = [8, 32], strides = [1, 1]} : vector<8x128xf32> to vector<8x32xf32>
    %189 = arith.mulf %186, %151 : vector<8x32xf32>
    %190 = arith.mulf %185, %187 : vector<8x32xf32>
    %191 = arith.addf %189, %190 : vector<8x32xf32>
    %192 = math.tanh %191 : vector<8x32xf32>
    %193 = arith.mulf %188, %192 : vector<8x32xf32>
    %c40 = arith.constant 40 : index
    %c0_68 = arith.constant 0 : index
    %194 = vector.load %arg10[%c40, %c0_68] : memref<64x128xf32, #tpu.memory_space<vmem>>, vector<8x128xf32>
    %c0_69 = arith.constant 0 : index
    %c0_70 = arith.constant 0 : index
    %195 = vector.load %arg3[%c0_69, %c0_70] : memref<32x128xf32, #tpu.memory_space<vmem>>, vector<32x128xf32>
    %cst_71 = arith.constant dense<0.000000e+00> : vector<8x128xf32>
    %196 = tpu.matmul %172, %195, %cst_71 {dimension_numbers = #tpu.dot_dimension_numbers<[1], [0], [0], [1], [0, 0, 1, 1], [], []>} : vector<8x32xf32>, vector<32x128xf32>, vector<8x128xf32> -> vector<8x128xf32>
    %197 = arith.addf %194, %196 : vector<8x128xf32>
    %198 = math.tanh %197 : vector<8x128xf32>
    %cst_72 = arith.constant 1.000000e+00 : f32
    %199 = vector.broadcast %cst_72 : f32 to vector<8x128xf32>
    %200 = arith.addf %198, %199 : vector<8x128xf32>
    %cst_73 = arith.constant 5.000000e-01 : f32
    %201 = vector.broadcast %cst_73 : f32 to vector<8x128xf32>
    %202 = arith.mulf %201, %200 : vector<8x128xf32>
    %203 = arith.select %13, %198, %202 : vector<8x128xi1>, vector<8x128xf32>
    %204 = vector.extract_strided_slice %203 {offsets = [0, 0], sizes = [8, 32], strides = [1, 1]} : vector<8x128xf32> to vector<8x32xf32>
    %205 = vector.extract_strided_slice %203 {offsets = [0, 32], sizes = [8, 32], strides = [1, 1]} : vector<8x128xf32> to vector<8x32xf32>
    %206 = vector.extract_strided_slice %203 {offsets = [0, 64], sizes = [8, 32], strides = [1, 1]} : vector<8x128xf32> to vector<8x32xf32>
    %207 = vector.extract_strided_slice %203 {offsets = [0, 96], sizes = [8, 32], strides = [1, 1]} : vector<8x128xf32> to vector<8x32xf32>
    %208 = arith.mulf %205, %170 : vector<8x32xf32>
    %209 = arith.mulf %204, %206 : vector<8x32xf32>
    %210 = arith.addf %208, %209 : vector<8x32xf32>
    %211 = math.tanh %210 : vector<8x32xf32>
    %212 = arith.mulf %207, %211 : vector<8x32xf32>
    %213 = tpu.concatenate %172, %193 in 1 : vector<8x32xf32>, vector<8x32xf32> -> vector<8x64xf32>
    %c0_74 = arith.constant 0 : index
    %c0_75 = arith.constant 0 : index
    %214 = vector.load %arg5[%c0_74, %c0_75] : memref<64x128xf32, #tpu.memory_space<vmem>>, vector<64x128xf32>
    %cst_76 = arith.constant dense<0.000000e+00> : vector<8x128xf32>
    %215 = tpu.matmul %213, %214, %cst_76 {dimension_numbers = #tpu.dot_dimension_numbers<[1], [0], [0], [1], [0, 0, 1, 1], [], []>} : vector<8x64xf32>, vector<64x128xf32>, vector<8x128xf32> -> vector<8x128xf32>
    %c0_77 = arith.constant 0 : index
    %c0_78 = arith.constant 0 : index
    %216 = vector.load %arg6[%c0_77, %c0_78] : memref<1x128xf32, #tpu.memory_space<vmem>>, vector<1x128xf32>
    %217 = vector.broadcast %216 : vector<1x128xf32> to vector<8x128xf32>
    %218 = arith.addf %215, %217 : vector<8x128xf32>
    %219 = math.tanh %218 : vector<8x128xf32>
    %cst_79 = arith.constant 1.000000e+00 : f32
    %220 = vector.broadcast %cst_79 : f32 to vector<8x128xf32>
    %221 = arith.addf %219, %220 : vector<8x128xf32>
    %cst_80 = arith.constant 5.000000e-01 : f32
    %222 = vector.broadcast %cst_80 : f32 to vector<8x128xf32>
    %223 = arith.mulf %222, %221 : vector<8x128xf32>
    %224 = arith.select %13, %219, %223 : vector<8x128xi1>, vector<8x128xf32>
    %225 = vector.extract_strided_slice %224 {offsets = [0, 0], sizes = [8, 32], strides = [1, 1]} : vector<8x128xf32> to vector<8x32xf32>
    %226 = vector.extract_strided_slice %224 {offsets = [0, 32], sizes = [8, 32], strides = [1, 1]} : vector<8x128xf32> to vector<8x32xf32>
    %227 = vector.extract_strided_slice %224 {offsets = [0, 64], sizes = [8, 32], strides = [1, 1]} : vector<8x128xf32> to vector<8x32xf32>
    %228 = vector.extract_strided_slice %224 {offsets = [0, 96], sizes = [8, 32], strides = [1, 1]} : vector<8x128xf32> to vector<8x32xf32>
    %229 = arith.mulf %226, %191 : vector<8x32xf32>
    %230 = arith.mulf %225, %227 : vector<8x32xf32>
    %231 = arith.addf %229, %230 : vector<8x32xf32>
    %232 = math.tanh %231 : vector<8x32xf32>
    %233 = arith.mulf %228, %232 : vector<8x32xf32>
    %c48 = arith.constant 48 : index
    %c0_81 = arith.constant 0 : index
    %234 = vector.load %arg10[%c48, %c0_81] : memref<64x128xf32, #tpu.memory_space<vmem>>, vector<8x128xf32>
    %c0_82 = arith.constant 0 : index
    %c0_83 = arith.constant 0 : index
    %235 = vector.load %arg3[%c0_82, %c0_83] : memref<32x128xf32, #tpu.memory_space<vmem>>, vector<32x128xf32>
    %cst_84 = arith.constant dense<0.000000e+00> : vector<8x128xf32>
    %236 = tpu.matmul %212, %235, %cst_84 {dimension_numbers = #tpu.dot_dimension_numbers<[1], [0], [0], [1], [0, 0, 1, 1], [], []>} : vector<8x32xf32>, vector<32x128xf32>, vector<8x128xf32> -> vector<8x128xf32>
    %237 = arith.addf %234, %236 : vector<8x128xf32>
    %238 = math.tanh %237 : vector<8x128xf32>
    %cst_85 = arith.constant 1.000000e+00 : f32
    %239 = vector.broadcast %cst_85 : f32 to vector<8x128xf32>
    %240 = arith.addf %238, %239 : vector<8x128xf32>
    %cst_86 = arith.constant 5.000000e-01 : f32
    %241 = vector.broadcast %cst_86 : f32 to vector<8x128xf32>
    %242 = arith.mulf %241, %240 : vector<8x128xf32>
    %243 = arith.select %13, %238, %242 : vector<8x128xi1>, vector<8x128xf32>
    %244 = vector.extract_strided_slice %243 {offsets = [0, 0], sizes = [8, 32], strides = [1, 1]} : vector<8x128xf32> to vector<8x32xf32>
    %245 = vector.extract_strided_slice %243 {offsets = [0, 32], sizes = [8, 32], strides = [1, 1]} : vector<8x128xf32> to vector<8x32xf32>
    %246 = vector.extract_strided_slice %243 {offsets = [0, 64], sizes = [8, 32], strides = [1, 1]} : vector<8x128xf32> to vector<8x32xf32>
    %247 = vector.extract_strided_slice %243 {offsets = [0, 96], sizes = [8, 32], strides = [1, 1]} : vector<8x128xf32> to vector<8x32xf32>
    %248 = arith.mulf %245, %210 : vector<8x32xf32>
    %249 = arith.mulf %244, %246 : vector<8x32xf32>
    %250 = arith.addf %248, %249 : vector<8x32xf32>
    %251 = math.tanh %250 : vector<8x32xf32>
    %252 = arith.mulf %247, %251 : vector<8x32xf32>
    %253 = tpu.concatenate %212, %233 in 1 : vector<8x32xf32>, vector<8x32xf32> -> vector<8x64xf32>
    %c0_87 = arith.constant 0 : index
    %c0_88 = arith.constant 0 : index
    %254 = vector.load %arg5[%c0_87, %c0_88] : memref<64x128xf32, #tpu.memory_space<vmem>>, vector<64x128xf32>
    %cst_89 = arith.constant dense<0.000000e+00> : vector<8x128xf32>
    %255 = tpu.matmul %253, %254, %cst_89 {dimension_numbers = #tpu.dot_dimension_numbers<[1], [0], [0], [1], [0, 0, 1, 1], [], []>} : vector<8x64xf32>, vector<64x128xf32>, vector<8x128xf32> -> vector<8x128xf32>
    %c0_90 = arith.constant 0 : index
    %c0_91 = arith.constant 0 : index
    %256 = vector.load %arg6[%c0_90, %c0_91] : memref<1x128xf32, #tpu.memory_space<vmem>>, vector<1x128xf32>
    %257 = vector.broadcast %256 : vector<1x128xf32> to vector<8x128xf32>
    %258 = arith.addf %255, %257 : vector<8x128xf32>
    %259 = math.tanh %258 : vector<8x128xf32>
    %cst_92 = arith.constant 1.000000e+00 : f32
    %260 = vector.broadcast %cst_92 : f32 to vector<8x128xf32>
    %261 = arith.addf %259, %260 : vector<8x128xf32>
    %cst_93 = arith.constant 5.000000e-01 : f32
    %262 = vector.broadcast %cst_93 : f32 to vector<8x128xf32>
    %263 = arith.mulf %262, %261 : vector<8x128xf32>
    %264 = arith.select %13, %259, %263 : vector<8x128xi1>, vector<8x128xf32>
    %265 = vector.extract_strided_slice %264 {offsets = [0, 0], sizes = [8, 32], strides = [1, 1]} : vector<8x128xf32> to vector<8x32xf32>
    %266 = vector.extract_strided_slice %264 {offsets = [0, 32], sizes = [8, 32], strides = [1, 1]} : vector<8x128xf32> to vector<8x32xf32>
    %267 = vector.extract_strided_slice %264 {offsets = [0, 64], sizes = [8, 32], strides = [1, 1]} : vector<8x128xf32> to vector<8x32xf32>
    %268 = vector.extract_strided_slice %264 {offsets = [0, 96], sizes = [8, 32], strides = [1, 1]} : vector<8x128xf32> to vector<8x32xf32>
    %269 = arith.mulf %266, %231 : vector<8x32xf32>
    %270 = arith.mulf %265, %267 : vector<8x32xf32>
    %271 = arith.addf %269, %270 : vector<8x32xf32>
    %272 = math.tanh %271 : vector<8x32xf32>
    %273 = arith.mulf %268, %272 : vector<8x32xf32>
    %c56 = arith.constant 56 : index
    %c0_94 = arith.constant 0 : index
    %274 = vector.load %arg10[%c56, %c0_94] : memref<64x128xf32, #tpu.memory_space<vmem>>, vector<8x128xf32>
    %c0_95 = arith.constant 0 : index
    %c0_96 = arith.constant 0 : index
    %275 = vector.load %arg3[%c0_95, %c0_96] : memref<32x128xf32, #tpu.memory_space<vmem>>, vector<32x128xf32>
    %cst_97 = arith.constant dense<0.000000e+00> : vector<8x128xf32>
    %276 = tpu.matmul %252, %275, %cst_97 {dimension_numbers = #tpu.dot_dimension_numbers<[1], [0], [0], [1], [0, 0, 1, 1], [], []>} : vector<8x32xf32>, vector<32x128xf32>, vector<8x128xf32> -> vector<8x128xf32>
    %277 = arith.addf %274, %276 : vector<8x128xf32>
    %278 = math.tanh %277 : vector<8x128xf32>
    %cst_98 = arith.constant 1.000000e+00 : f32
    %279 = vector.broadcast %cst_98 : f32 to vector<8x128xf32>
    %280 = arith.addf %278, %279 : vector<8x128xf32>
    %cst_99 = arith.constant 5.000000e-01 : f32
    %281 = vector.broadcast %cst_99 : f32 to vector<8x128xf32>
    %282 = arith.mulf %281, %280 : vector<8x128xf32>
    %283 = arith.select %13, %278, %282 : vector<8x128xi1>, vector<8x128xf32>
    %284 = vector.extract_strided_slice %283 {offsets = [0, 0], sizes = [8, 32], strides = [1, 1]} : vector<8x128xf32> to vector<8x32xf32>
    %285 = vector.extract_strided_slice %283 {offsets = [0, 32], sizes = [8, 32], strides = [1, 1]} : vector<8x128xf32> to vector<8x32xf32>
    %286 = vector.extract_strided_slice %283 {offsets = [0, 64], sizes = [8, 32], strides = [1, 1]} : vector<8x128xf32> to vector<8x32xf32>
    %287 = vector.extract_strided_slice %283 {offsets = [0, 96], sizes = [8, 32], strides = [1, 1]} : vector<8x128xf32> to vector<8x32xf32>
    %288 = arith.mulf %285, %250 : vector<8x32xf32>
    %289 = arith.mulf %284, %286 : vector<8x32xf32>
    %290 = arith.addf %288, %289 : vector<8x32xf32>
    %291 = math.tanh %290 : vector<8x32xf32>
    %292 = arith.mulf %287, %291 : vector<8x32xf32>
    %293 = tpu.concatenate %252, %273 in 1 : vector<8x32xf32>, vector<8x32xf32> -> vector<8x64xf32>
    %c0_100 = arith.constant 0 : index
    %c0_101 = arith.constant 0 : index
    %294 = vector.load %arg5[%c0_100, %c0_101] : memref<64x128xf32, #tpu.memory_space<vmem>>, vector<64x128xf32>
    %cst_102 = arith.constant dense<0.000000e+00> : vector<8x128xf32>
    %295 = tpu.matmul %293, %294, %cst_102 {dimension_numbers = #tpu.dot_dimension_numbers<[1], [0], [0], [1], [0, 0, 1, 1], [], []>} : vector<8x64xf32>, vector<64x128xf32>, vector<8x128xf32> -> vector<8x128xf32>
    %c0_103 = arith.constant 0 : index
    %c0_104 = arith.constant 0 : index
    %296 = vector.load %arg6[%c0_103, %c0_104] : memref<1x128xf32, #tpu.memory_space<vmem>>, vector<1x128xf32>
    %297 = vector.broadcast %296 : vector<1x128xf32> to vector<8x128xf32>
    %298 = arith.addf %295, %297 : vector<8x128xf32>
    %299 = math.tanh %298 : vector<8x128xf32>
    %cst_105 = arith.constant 1.000000e+00 : f32
    %300 = vector.broadcast %cst_105 : f32 to vector<8x128xf32>
    %301 = arith.addf %299, %300 : vector<8x128xf32>
    %cst_106 = arith.constant 5.000000e-01 : f32
    %302 = vector.broadcast %cst_106 : f32 to vector<8x128xf32>
    %303 = arith.mulf %302, %301 : vector<8x128xf32>
    %304 = arith.select %13, %299, %303 : vector<8x128xi1>, vector<8x128xf32>
    %305 = vector.extract_strided_slice %304 {offsets = [0, 0], sizes = [8, 32], strides = [1, 1]} : vector<8x128xf32> to vector<8x32xf32>
    %306 = vector.extract_strided_slice %304 {offsets = [0, 32], sizes = [8, 32], strides = [1, 1]} : vector<8x128xf32> to vector<8x32xf32>
    %307 = vector.extract_strided_slice %304 {offsets = [0, 64], sizes = [8, 32], strides = [1, 1]} : vector<8x128xf32> to vector<8x32xf32>
    %308 = vector.extract_strided_slice %304 {offsets = [0, 96], sizes = [8, 32], strides = [1, 1]} : vector<8x128xf32> to vector<8x32xf32>
    %309 = arith.mulf %306, %271 : vector<8x32xf32>
    %310 = arith.mulf %305, %307 : vector<8x32xf32>
    %311 = arith.addf %309, %310 : vector<8x32xf32>
    %312 = math.tanh %311 : vector<8x32xf32>
    %313 = arith.mulf %308, %312 : vector<8x32xf32>
    %314 = tpu.concatenate %292, %313 in 1 : vector<8x32xf32>, vector<8x32xf32> -> vector<8x64xf32>
    %c0_107 = arith.constant 0 : index
    %c0_108 = arith.constant 0 : index
    %315 = vector.load %arg5[%c0_107, %c0_108] : memref<64x128xf32, #tpu.memory_space<vmem>>, vector<64x128xf32>
    %cst_109 = arith.constant dense<0.000000e+00> : vector<8x128xf32>
    %316 = tpu.matmul %314, %315, %cst_109 {dimension_numbers = #tpu.dot_dimension_numbers<[1], [0], [0], [1], [0, 0, 1, 1], [], []>} : vector<8x64xf32>, vector<64x128xf32>, vector<8x128xf32> -> vector<8x128xf32>
    %c0_110 = arith.constant 0 : index
    %c0_111 = arith.constant 0 : index
    %317 = vector.load %arg6[%c0_110, %c0_111] : memref<1x128xf32, #tpu.memory_space<vmem>>, vector<1x128xf32>
    %318 = vector.broadcast %317 : vector<1x128xf32> to vector<8x128xf32>
    %319 = arith.addf %316, %318 : vector<8x128xf32>
    %320 = math.tanh %319 : vector<8x128xf32>
    %cst_112 = arith.constant 1.000000e+00 : f32
    %321 = vector.broadcast %cst_112 : f32 to vector<8x128xf32>
    %322 = arith.addf %320, %321 : vector<8x128xf32>
    %cst_113 = arith.constant 5.000000e-01 : f32
    %323 = vector.broadcast %cst_113 : f32 to vector<8x128xf32>
    %324 = arith.mulf %323, %322 : vector<8x128xf32>
    %325 = arith.select %13, %320, %324 : vector<8x128xi1>, vector<8x128xf32>
    %326 = vector.extract_strided_slice %325 {offsets = [0, 0], sizes = [8, 32], strides = [1, 1]} : vector<8x128xf32> to vector<8x32xf32>
    %327 = vector.extract_strided_slice %325 {offsets = [0, 32], sizes = [8, 32], strides = [1, 1]} : vector<8x128xf32> to vector<8x32xf32>
    %328 = vector.extract_strided_slice %325 {offsets = [0, 64], sizes = [8, 32], strides = [1, 1]} : vector<8x128xf32> to vector<8x32xf32>
    %329 = vector.extract_strided_slice %325 {offsets = [0, 96], sizes = [8, 32], strides = [1, 1]} : vector<8x128xf32> to vector<8x32xf32>
    %330 = arith.mulf %327, %311 : vector<8x32xf32>
    %331 = arith.mulf %326, %328 : vector<8x32xf32>
    %332 = arith.addf %330, %331 : vector<8x32xf32>
    %333 = math.tanh %332 : vector<8x32xf32>
    %334 = arith.mulf %329, %333 : vector<8x32xf32>
    %c0_114 = arith.constant 0 : index
    %c0_115 = arith.constant 0 : index
    %335 = vector.load %arg7[%c0_114, %c0_115] : memref<1x32xf32, #tpu.memory_space<vmem>>, vector<1x32xf32>
    %336 = vector.broadcast %335 : vector<1x32xf32> to vector<8x32xf32>
    %337 = arith.mulf %334, %336 : vector<8x32xf32>
    %cst_116 = arith.constant dense<0.000000e+00> : vector<8xf32>
    %338 = vector.multi_reduction <add>, %337, %cst_116 [1] : vector<8x32xf32> to vector<8xf32>
    %339 = vector.shape_cast %338 : vector<8xf32> to vector<8x1xf32>
    %c0_117 = arith.constant 0 : index
    %c0_118 = arith.constant 0 : index
    %340 = memref.load %arg8[%c0_117, %c0_118] : memref<1x1xf32, #tpu.memory_space<smem>>
    %341 = vector.broadcast %340 : f32 to vector<8x1xf32>
    %342 = arith.addf %339, %341 : vector<8x1xf32>
    %cst_119 = arith.constant 5.000000e-01 : f32
    %343 = vector.broadcast %cst_119 : f32 to vector<8x1xf32>
    %344 = arith.mulf %343, %342 : vector<8x1xf32>
    %345 = math.tanh %344 : vector<8x1xf32>
    %cst_120 = arith.constant 1.000000e+00 : f32
    %346 = vector.broadcast %cst_120 : f32 to vector<8x1xf32>
    %347 = arith.addf %345, %346 : vector<8x1xf32>
    %cst_121 = arith.constant 5.000000e-01 : f32
    %348 = vector.broadcast %cst_121 : f32 to vector<8x1xf32>
    %349 = arith.mulf %348, %347 : vector<8x1xf32>
    %c0_122 = arith.constant 0 : index
    %c0_123 = arith.constant 0 : index
    %350 = vector.load %arg9[%c0_122, %c0_123] : memref<8x1xf32, #tpu.memory_space<vmem>>, vector<8x1xf32>
    tpu.vector_store %arg9[%c0_122, %c0_123], %349 {strides = array<i32>} : memref<8x1xf32, #tpu.memory_space<vmem>>, vector<8x1xf32>,
    return
  }
  func.func @transform_0(%arg0: i32) -> (i32, i32, i32) {
    %c0_i32 = arith.constant 0 : i32
    %c0_i32_0 = arith.constant 0 : i32
    %c0_i32_1 = arith.constant 0 : i32
    return %arg0, %c0_i32, %c0_i32_0 : i32, i32, i32
  }
  func.func @transform_1(%arg0: i32) -> (i32, i32) {
    %c0_i32 = arith.constant 0 : i32
    %c0_i32_0 = arith.constant 0 : i32
    %c0_i32_1 = arith.constant 0 : i32
    return %c0_i32, %c0_i32_0 : i32, i32
  }
  func.func @transform_2(%arg0: i32) -> (i32, i32) {
    %c0_i32 = arith.constant 0 : i32
    %c0_i32_0 = arith.constant 0 : i32
    %c0_i32_1 = arith.constant 0 : i32
    return %c0_i32, %c0_i32_0 : i32, i32
  }
  func.func @transform_3(%arg0: i32) -> (i32, i32) {
    %c0_i32 = arith.constant 0 : i32
    %c0_i32_0 = arith.constant 0 : i32
    %c0_i32_1 = arith.constant 0 : i32
    return %c0_i32, %c0_i32_0 : i32, i32
  }
  func.func @transform_4(%arg0: i32) -> (i32, i32) {
    %c0_i32 = arith.constant 0 : i32
    %c0_i32_0 = arith.constant 0 : i32
    %c0_i32_1 = arith.constant 0 : i32
    return %c0_i32, %c0_i32_0 : i32, i32
  }
  func.func @transform_5(%arg0: i32) -> (i32, i32) {
    %c0_i32 = arith.constant 0 : i32
    %c0_i32_0 = arith.constant 0 : i32
    %c0_i32_1 = arith.constant 0 : i32
    return %c0_i32, %c0_i32_0 : i32, i32
  }
  func.func @transform_6(%arg0: i32) -> (i32, i32) {
    %c0_i32 = arith.constant 0 : i32
    %c0_i32_0 = arith.constant 0 : i32
    %c0_i32_1 = arith.constant 0 : i32
    return %c0_i32, %c0_i32_0 : i32, i32
  }
  func.func @transform_7(%arg0: i32) -> (i32, i32) {
    %c0_i32 = arith.constant 0 : i32
    %c0_i32_0 = arith.constant 0 : i32
    %c0_i32_1 = arith.constant 0 : i32
    return %c0_i32, %c0_i32_0 : i32, i32
  }
  func.func @transform_8(%arg0: i32) -> (i32, i32) {
    %c0_i32 = arith.constant 0 : i32
    %c0_i32_0 = arith.constant 0 : i32
    return %arg0, %c0_i32 : i32, i32
  }
}

</mosaic_0001>

<llo_original>
// kernel: tpu_custom_call.1
$region0: #{tpu_custom_call.1}
  #allocation0 [shape = 'u32[]', space=smem, size = 0x4, offset = 0x4, fixed_abs, tag = 'smem constant byte address 0x4 - core index']
  #allocation1 [shape = 'u32[72,128]{1,0:T(1,128)}', space=vmem, size = 0x9000, scoped, tag = 'internal scratch']
  #allocation2 [shape = 'f32[64,128]{1,0:T(8,128)}', space=vmem, size = 0x8000, scoped, tag = 'scratch operand']
  #allocation3 [shape = 'f32[1,1]{1,0:T(1,128)S(6)}', space=smem, size = 0x200, scoped, tag = 'scoped memory for tpu_custom_call.1']
  %s0 = inlined_call_operand.vmem [shape: f32[1,64,16], index: 0, kind: input, shape index: {}]
  %s1 = inlined_call_operand.vmem [shape: f32[16,128], index: 1, kind: input, shape index: {}]
  %s2 = inlined_call_operand.hbm [shape: f32[32,128], index: 2, kind: input, shape index: {}]
  %s3 = inlined_call_operand.vmem [shape: f32[1,128], index: 3, kind: input, shape index: {}]
  %s4 = inlined_call_operand.vmem [shape: f32[64,128], index: 4, kind: input, shape index: {}]
  %s5 = inlined_call_operand.vmem [shape: f32[1,128], index: 5, kind: input, shape index: {}]
  %s6 = inlined_call_operand.vmem [shape: f32[1,32], index: 6, kind: input, shape index: {}]
  %s7 = inlined_call_operand.<no memory space> [shape: f32[1,1], index: 7, kind: input, shape index: {}]
  %s8 = inlined_call_operand.vmem [shape: f32[8,1], index: 8, kind: output, shape index: {}]
  %s9 = sld [smem:[#allocation0]]
  $region46: #{tpu_custom_call.1} parent=0
    _
  %s11 = ssub.s32 1, %s9
  %s12 = scalar_select 0, %s11, %s9
  %13 = sst [smem:[#allocation3]] %s7
  $region1: #{tpu_custom_call.1} parent=0
    #allocation4 [shape = 'u8[16384]{0}', space=vmem, size = 0x4000, scoped, tag = 'input window, operand 2, single buffered']
    #allocation5 [shape = 's32[1]{0}', space=sflag, size = 0x4, scoped, tag = 'scoped memory for tpu_custom_call.1']
    %14 = vsyncpa [#allocation5], 0
    // Predicated region
    $region2: #{tpu_custom_call.1} parent=1 // pred_check
      _
    $region3: #{tpu_custom_call.1} parent=1 // pred_check_branch
      %16 = sbr.rel (0) target = $region5
    $region4: #{tpu_custom_call.1} parent=1 // pred_region
      _
    $region5: #{tpu_custom_call.1} parent=1 // pred_fallthru
      _
    // Predicated region
    $region6: #{tpu_custom_call.1} parent=1 // pred_check
      _
    $region7: #{tpu_custom_call.1} parent=1 // pred_check_branch
      %18 = sbr.rel (0) target = $region9
    $region8: #{tpu_custom_call.1} parent=1 // pred_region
      _
    $region9: #{tpu_custom_call.1} parent=1 // pred_fallthru
      _
    // Predicated region
    $region10: #{tpu_custom_call.1} parent=1 // pred_check
      _
    $region11: #{tpu_custom_call.1} parent=1 // pred_check_branch
      %20 = sbr.rel (0) target = $region13
    $region12: #{tpu_custom_call.1} parent=1 // pred_region
      %22 = vsyncadd [#allocation5], 0
      %s23 = sshll.u32 %s2, 4
      %s24 = int_to_ptr.hbm [resolvable:$true] %s23
      %s25 = sshll.u32 [#allocation4], 4
      %s26 = int_to_ptr.vmem [resolvable:$true] %s25
      %31 = dma.hbm_to_vmem [thread:$0]  %s24, 512, %s26, [#allocation5], 128, 128, 8
    $region13: #{tpu_custom_call.1} parent=1 // pred_fallthru
      _
    // Predicated region
    $region14: #{tpu_custom_call.1} parent=1 // pred_check
      _
    $region15: #{tpu_custom_call.1} parent=1 // pred_check_branch
      %33 = sbr.rel (0) target = $region17
    $region16: #{tpu_custom_call.1} parent=1 // pred_region
      _
    $region17: #{tpu_custom_call.1} parent=1 // pred_fallthru
      _
    // Predicated region
    $region18: #{tpu_custom_call.1} parent=1 // pred_check
      _
    $region19: #{tpu_custom_call.1} parent=1 // pred_check_branch
      %35 = sbr.rel (0) target = $region21
    $region20: #{tpu_custom_call.1} parent=1 // pred_region
      _
    $region21: #{tpu_custom_call.1} parent=1 // pred_fallthru
      _
    // Predicated region
    $region22: #{tpu_custom_call.1} parent=1 // pred_check
      _
    $region23: #{tpu_custom_call.1} parent=1 // pred_check_branch
      %37 = sbr.rel (0) target = $region25
    $region24: #{tpu_custom_call.1} parent=1 // pred_region
      _
    $region25: #{tpu_custom_call.1} parent=1 // pred_fallthru
      _
    // Predicated region
    $region26: #{tpu_custom_call.1} parent=1 // pred_check
      _
    $region27: #{tpu_custom_call.1} parent=1 // pred_check_branch
      %39 = sbr.rel (0) target = $region29
    $region28: #{tpu_custom_call.1} parent=1 // pred_region
      _
    $region29: #{tpu_custom_call.1} parent=1 // pred_fallthru
      _
    // Predicated region
    $region30: #{tpu_custom_call.1} parent=1 // pred_check
      _
    $region31: #{tpu_custom_call.1} parent=1 // pred_check_branch
      %41 = sbr.rel (0) target = $region33
    $region32: #{tpu_custom_call.1} parent=1 // pred_region
      _
    $region33: #{tpu_custom_call.1} parent=1 // pred_fallthru
      _
    // Predicated region
    $region34: #{tpu_custom_call.1} parent=1 // pred_check
      _
    $region35: #{tpu_custom_call.1} parent=1 // pred_check_branch
      %43 = sbr.rel (0) target = $region37
    $region36: #{tpu_custom_call.1} parent=1 // pred_region
      %45 = dma.done [#allocation5], 512
    $region37: #{tpu_custom_call.1} parent=1 // pred_fallthru
      _
    %v46 = vld [vmem:[%s0] sm:$0xff]
    %v47 = vld [vmem:[%s0 + $0x8] sm:$0xff]
    %v48 = vld [vmem:[%s0 + $0x10] sm:$0xff]
    %v49 = vld [vmem:[%s0 + $0x18] sm:$0xff]
    %v50 = vld [vmem:[%s0 + $0x20] sm:$0xff]
    %v51 = vld [vmem:[%s0 + $0x28] sm:$0xff]
    %v52 = vld [vmem:[%s0 + $0x30] sm:$0xff]
    %v53 = vld [vmem:[%s0 + $0x38] sm:$0xff]
    %v54 = vld [vmem:[%s1] sm:$0xff]
    %v55 = vld [vmem:[%s1 + $0x8] sm:$0xff]
    %v56 = vld [vmem:[%s3] sm:$0x1]
    %v58 = vperm.slane %v56, 0
    %vm60 = vcmask 130048
    %v62 = vsel %vm60, %v46, 0
    %v65 = vsel %vm60, %v47, 0
    %v68 = vsel %vm60, %v48, 0
    %v71 = vsel %vm60, %v49, 0
    %v74 = vsel %vm60, %v50, 0
    %v77 = vsel %vm60, %v51, 0
    %v80 = vsel %vm60, %v52, 0
    %v83 = vsel %vm60, %v53, 0
    %85 = vmatpush.msra.mxu0 0.0
    %86 = vmatpush.msra.mxu0 0.0
    %87 = vmatpush.msra.mxu0 0.0
    %88 = vmatpush.msra.mxu0 0.0
    %89 = vmatpush.msra.mxu0 0.0
    %90 = vmatpush.msra.mxu0 0.0
    %91 = vmatpush.msra.mxu0 0.0
    %92 = vmatpush.msra.mxu0 0.0
    %93 = vmatpush.msra.mxu0 0.0
    %94 = vmatpush.msra.mxu0 0.0
    %95 = vmatpush.msra.mxu0 0.0
    %96 = vmatpush.msra.mxu0 0.0
    %97 = vmatpush.msra.mxu0 0.0
    %98 = vmatpush.msra.mxu0 0.0
    %99 = vmatpush.msra.mxu0 %v55
    %100 = vmatpush.msra.mxu0 %v54
    %101 = vmatmul.f32.gmra.mxu0 %v62
    %v102 = vpop.f32.mrf.mxu0
    %v103 = vadd.f32 %v58, %v102
    %104 = vmatmul.f32.gmra.mxu0 %v65
    %v105 = vpop.f32.mrf.mxu0
    %v106 = vadd.f32 %v58, %v105
    %107 = vmatmul.f32.gmra.mxu0 %v68
    %v108 = vpop.f32.mrf.mxu0
    %v109 = vadd.f32 %v58, %v108
    %110 = vmatmul.f32.gmra.mxu0 %v71
    %v111 = vpop.f32.mrf.mxu0
    %v112 = vadd.f32 %v58, %v111
    %113 = vmatmul.f32.gmra.mxu0 %v74
    %v114 = vpop.f32.mrf.mxu0
    %v115 = vadd.f32 %v58, %v114
    %116 = vmatmul.f32.gmra.mxu0 %v77
    %v117 = vpop.f32.mrf.mxu0
    %v118 = vadd.f32 %v58, %v117
    %119 = vmatmul.f32.gmra.mxu0 %v80
    %v120 = vpop.f32.mrf.mxu0
    %v121 = vadd.f32 %v58, %v120
    %122 = vmatmul.f32.gmra.mxu0 %v83
    %v123 = vpop.f32.mrf.mxu0
    %v124 = vadd.f32 %v58, %v123
    %125 = vdwg.mxu0
    %126 = vst [vmem:[#allocation2] sm:$0xff] %v103
    %127 = vst [vmem:[#allocation2 + $0x8] sm:$0xff] %v106
    %128 = vst [vmem:[#allocation2 + $0x10] sm:$0xff] %v109
    %129 = vst [vmem:[#allocation2 + $0x18] sm:$0xff] %v112
    %130 = vst [vmem:[#allocation2 + $0x20] sm:$0xff] %v115
    %131 = vst [vmem:[#allocation2 + $0x28] sm:$0xff] %v118
    %132 = vst [vmem:[#allocation2 + $0x30] sm:$0xff] %v121
    %133 = vst [vmem:[#allocation2 + $0x38] sm:$0xff] %v124
    %v134 = vlaneseq
    %v135 = vand.u32 %v134, 127
    %vm136 = vcmp.ge.s32.totalorder %v135, 64
    %vm137 = vcmp.lt.s32.totalorder %v135, 96
    %vm138 = vmand %vm136, %vm137
    %v139 = vld [vmem:[#allocation2] sm:$0xff]
    %v140 = vld [vmem:[#allocation4] sm:$0xff]
    %v141 = vld [vmem:[#allocation4 + $0x8] sm:$0xff]
    %v142 = vld [vmem:[#allocation4 + $0x10] sm:$0xff]
    %v143 = vld [vmem:[#allocation4 + $0x18] sm:$0xff]
    %vm144 = vcmask 261120
    %v146 = vsel %vm144, 0.0, 0
    %148 = vmatpush.msra.mxu0 0.0
    %149 = vmatpush.msra.mxu0 0.0
    %150 = vmatpush.msra.mxu0 0.0
    %151 = vmatpush.msra.mxu0 0.0
    %152 = vmatpush.msra.mxu0 0.0
    %153 = vmatpush.msra.mxu0 0.0
    %154 = vmatpush.msra.mxu0 0.0
    %155 = vmatpush.msra.mxu0 0.0
    %156 = vmatpush.msra.mxu0 0.0
    %157 = vmatpush.msra.mxu0 0.0
    %158 = vmatpush.msra.mxu0 0.0
    %159 = vmatpush.msra.mxu0 0.0
    %160 = vmatpush.msra.mxu0 %v143
    %161 = vmatpush.msra.mxu0 %v142
    %162 = vmatpush.msra.mxu0 %v141
    %163 = vmatpush.msra.mxu0 %v140
    %164 = vmatmul.f32.gmra.mxu0 %v146
    %v165 = vpop.f32.mrf.mxu0
    %v166 = vadd.f32 0.0, %v165
    %167 = vdwg.mxu0
    %v168 = vadd.f32 %v139, %v166
    %v169 = vtanh.pop %v168
    %v170 = vadd.f32 %v169, 1.0
    %v171 = vmul.f32 %v170, 0.5
    %v172 = vsel %vm138, %v169, %v171
    %v173 = vmul.f32 %v172, 0.0
    %175 = vrot.lane.b32.xlu0 %v172, 64
    %v176 = vpop.permute.xlu0 %175
    %v178 = vmul.f32 %v172, %v176
    %180 = vrot.lane.b32.xlu0 %v178, 32
    %v181 = vpop.permute.xlu0 %180
    %v183 = vadd.f32 %v173, %v181
    %v184 = vtanh.pop %v183
    %186 = vrot.lane.b32.xlu0 %v184, 64
    %v187 = vpop.permute.xlu0 %186
    %v189 = vmul.f32 %v172, %v187
    %v190 = vld [vmem:[#allocation2 + $0x8] sm:$0xff]
    %192 = vrot.lane.b32.xlu0 %v189, 32
    %v193 = vpop.permute.xlu0 %192
    %v194 = vsel %vm144, %v193, 0
    %196 = vmatpush.msra.mxu0 0.0
    %197 = vmatpush.msra.mxu0 0.0
    %198 = vmatpush.msra.mxu0 0.0
    %199 = vmatpush.msra.mxu0 0.0
    %200 = vmatpush.msra.mxu0 0.0
    %201 = vmatpush.msra.mxu0 0.0
    %202 = vmatpush.msra.mxu0 0.0
    %203 = vmatpush.msra.mxu0 0.0
    %204 = vmatpush.msra.mxu0 0.0
    %205 = vmatpush.msra.mxu0 0.0
    %206 = vmatpush.msra.mxu0 0.0
    %207 = vmatpush.msra.mxu0 0.0
    %208 = vmatpush.msra.mxu0 %v143
    %209 = vmatpush.msra.mxu0 %v142
    %210 = vmatpush.msra.mxu0 %v141
    %211 = vmatpush.msra.mxu0 %v140
    %212 = vmatmul.f32.gmra.mxu0 %v194
    %v213 = vpop.f32.mrf.mxu0
    %v214 = vadd.f32 0.0, %v213
    %215 = vdwg.mxu0
    %v216 = vadd.f32 %v190, %v214
    %v217 = vtanh.pop %v216
    %v218 = vadd.f32 %v217, 1.0
    %v219 = vmul.f32 %v218, 0.5
    %v220 = vsel %vm138, %v217, %v219
    %v221 = vmul.f32 %v220, %v183
    %223 = vrot.lane.b32.xlu0 %v220, 64
    %v224 = vpop.permute.xlu0 %223
    %v226 = vmul.f32 %v220, %v224
    %228 = vrot.lane.b32.xlu0 %v226, 32
    %v229 = vpop.permute.xlu0 %228
    %v231 = vadd.f32 %v221, %v229
    %v232 = vtanh.pop %v231
    %234 = vrot.lane.b32.xlu0 %v232, 64
    %v235 = vpop.permute.xlu0 %234
    %v237 = vmul.f32 %v220, %v235
    %v239 = vsel %vm144, %v193, 0.0
    %v240 = vld [vmem:[%s4] sm:$0xff]
    %v241 = vld [vmem:[%s4 + $0x8] sm:$0xff]
    %v242 = vld [vmem:[%s4 + $0x10] sm:$0xff]
    %v243 = vld [vmem:[%s4 + $0x18] sm:$0xff]
    %v244 = vld [vmem:[%s4 + $0x20] sm:$0xff]
    %v245 = vld [vmem:[%s4 + $0x28] sm:$0xff]
    %v246 = vld [vmem:[%s4 + $0x30] sm:$0xff]
    %v247 = vld [vmem:[%s4 + $0x38] sm:$0xff]
    %v248 = vld [vmem:[%s5] sm:$0x1]
    %v250 = vperm.slane %v248, 0
    %vm252 = vcmask 523264
    %v254 = vsel %vm252, %v239, 0
    %256 = vmatpush.msra.mxu0 0.0
    %257 = vmatpush.msra.mxu0 0.0
    %258 = vmatpush.msra.mxu0 0.0
    %259 = vmatpush.msra.mxu0 0.0
    %260 = vmatpush.msra.mxu0 0.0
    %261 = vmatpush.msra.mxu0 0.0
    %262 = vmatpush.msra.mxu0 0.0
    %263 = vmatpush.msra.mxu0 0.0
    %264 = vmatpush.msra.mxu0 %v247
    %265 = vmatpush.msra.mxu0 %v246
    %266 = vmatpush.msra.mxu0 %v245
    %267 = vmatpush.msra.mxu0 %v244
    %268 = vmatpush.msra.mxu0 %v243
    %269 = vmatpush.msra.mxu0 %v242
    %270 = vmatpush.msra.mxu0 %v241
    %271 = vmatpush.msra.mxu0 %v240
    %272 = vmatmul.f32.gmra.mxu0 %v254
    %v273 = vpop.f32.mrf.mxu0
    %v274 = vadd.f32 %v250, %v273
    %275 = vdwg.mxu0
    %v276 = vtanh.pop %v274
    %v277 = vadd.f32 %v276, 1.0
    %v278 = vmul.f32 %v277, 0.5
    %v279 = vsel %vm138, %v276, %v278
    %v280 = vmul.f32 %v279, 0.0
    %282 = vrot.lane.b32.xlu0 %v279, 64
    %v283 = vpop.permute.xlu0 %282
    %v285 = vmul.f32 %v279, %v283
    %287 = vrot.lane.b32.xlu0 %v285, 32
    %v288 = vpop.permute.xlu0 %287
    %v290 = vadd.f32 %v280, %v288
    %v291 = vtanh.pop %v290
    %293 = vrot.lane.b32.xlu0 %v291, 64
    %v294 = vpop.permute.xlu0 %293
    %v296 = vmul.f32 %v279, %v294
    %v297 = vld [vmem:[#allocation2 + $0x10] sm:$0xff]
    %299 = vrot.lane.b32.xlu0 %v237, 32
    %v300 = vpop.permute.xlu0 %299
    %v301 = vsel %vm144, %v300, 0
    %303 = vmatpush.msra.mxu0 0.0
    %304 = vmatpush.msra.mxu0 0.0
    %305 = vmatpush.msra.mxu0 0.0
    %306 = vmatpush.msra.mxu0 0.0
    %307 = vmatpush.msra.mxu0 0.0
    %308 = vmatpush.msra.mxu0 0.0
    %309 = vmatpush.msra.mxu0 0.0
    %310 = vmatpush.msra.mxu0 0.0
    %311 = vmatpush.msra.mxu0 0.0
    %312 = vmatpush.msra.mxu0 0.0
    %313 = vmatpush.msra.mxu0 0.0
    %314 = vmatpush.msra.mxu0 0.0
    %315 = vmatpush.msra.mxu0 %v143
    %316 = vmatpush.msra.mxu0 %v142
    %317 = vmatpush.msra.mxu0 %v141
    %318 = vmatpush.msra.mxu0 %v140
    %319 = vmatmul.f32.gmra.mxu0 %v301
    %v320 = vpop.f32.mrf.mxu0
    %v321 = vadd.f32 0.0, %v320
    %322 = vdwg.mxu0
    %v323 = vadd.f32 %v297, %v321
    %v324 = vtanh.pop %v323
    %v325 = vadd.f32 %v324, 1.0
    %v326 = vmul.f32 %v325, 0.5
    %v327 = vsel %vm138, %v324, %v326
    %v328 = vmul.f32 %v327, %v231
    %330 = vrot.lane.b32.xlu0 %v327, 64
    %v331 = vpop.permute.xlu0 %330
    %v333 = vmul.f32 %v327, %v331
    %335 = vrot.lane.b32.xlu0 %v333, 32
    %v336 = vpop.permute.xlu0 %335
    %v338 = vadd.f32 %v328, %v336
    %v339 = vtanh.pop %v338
    %341 = vrot.lane.b32.xlu0 %v339, 64
    %v342 = vpop.permute.xlu0 %341
    %v344 = vmul.f32 %v327, %v342
    %347 = vrot.lane.b32.xlu0 %v296, 64
    %v348 = vpop.permute.xlu0 %347
    %v350 = vsel %vm144, %v300, %v348
    %v352 = vsel %vm252, %v350, 0
    %354 = vmatpush.msra.mxu0 0.0
    %355 = vmatpush.msra.mxu0 0.0
    %356 = vmatpush.msra.mxu0 0.0
    %357 = vmatpush.msra.mxu0 0.0
    %358 = vmatpush.msra.mxu0 0.0
    %359 = vmatpush.msra.mxu0 0.0
    %360 = vmatpush.msra.mxu0 0.0
    %361 = vmatpush.msra.mxu0 0.0
    %362 = vmatpush.msra.mxu0 %v247
    %363 = vmatpush.msra.mxu0 %v246
    %364 = vmatpush.msra.mxu0 %v245
    %365 = vmatpush.msra.mxu0 %v244
    %366 = vmatpush.msra.mxu0 %v243
    %367 = vmatpush.msra.mxu0 %v242
    %368 = vmatpush.msra.mxu0 %v241
    %369 = vmatpush.msra.mxu0 %v240
    %370 = vmatmul.f32.gmra.mxu0 %v352
    %v371 = vpop.f32.mrf.mxu0
    %v372 = vadd.f32 %v250, %v371
    %373 = vdwg.mxu0
    %v374 = vtanh.pop %v372
    %v375 = vadd.f32 %v374, 1.0
    %v376 = vmul.f32 %v375, 0.5
    %v377 = vsel %vm138, %v374, %v376
    %v378 = vmul.f32 %v377, %v290
    %380 = vrot.lane.b32.xlu0 %v377, 64
    %v381 = vpop.permute.xlu0 %380
    %v383 = vmul.f32 %v377, %v381
    %385 = vrot.lane.b32.xlu0 %v383, 32
    %v386 = vpop.permute.xlu0 %385
    %v388 = vadd.f32 %v378, %v386
    %v389 = vtanh.pop %v388
    %391 = vrot.lane.b32.xlu0 %v389, 64
    %v392 = vpop.permute.xlu0 %391
    %v394 = vmul.f32 %v377, %v392
    %v395 = vld [vmem:[#allocation2 + $0x18] sm:$0xff]
    %397 = vrot.lane.b32.xlu0 %v344, 32
    %v398 = vpop.permute.xlu0 %397
    %v399 = vsel %vm144, %v398, 0
    %401 = vmatpush.msra.mxu0 0.0
    %402 = vmatpush.msra.mxu0 0.0
    %403 = vmatpush.msra.mxu0 0.0
    %404 = vmatpush.msra.mxu0 0.0
    %405 = vmatpush.msra.mxu0 0.0
    %406 = vmatpush.msra.mxu0 0.0
    %407 = vmatpush.msra.mxu0 0.0
    %408 = vmatpush.msra.mxu0 0.0
    %409 = vmatpush.msra.mxu0 0.0
    %410 = vmatpush.msra.mxu0 0.0
    %411 = vmatpush.msra.mxu0 0.0
    %412 = vmatpush.msra.mxu0 0.0
    %413 = vmatpush.msra.mxu0 %v143
    %414 = vmatpush.msra.mxu0 %v142
    %415 = vmatpush.msra.mxu0 %v141
    %416 = vmatpush.msra.mxu0 %v140
    %417 = vmatmul.f32.gmra.mxu0 %v399
    %v418 = vpop.f32.mrf.mxu0
    %v419 = vadd.f32 0.0, %v418
    %420 = vdwg.mxu0
    %v421 = vadd.f32 %v395, %v419
    %v422 = vtanh.pop %v421
    %v423 = vadd.f32 %v422, 1.0
    %v424 = vmul.f32 %v423, 0.5
    %v425 = vsel %vm138, %v422, %v424
    %v426 = vmul.f32 %v425, %v338
    %428 = vrot.lane.b32.xlu0 %v425, 64
    %v429 = vpop.permute.xlu0 %428
    %v431 = vmul.f32 %v425, %v429
    %433 = vrot.lane.b32.xlu0 %v431, 32
    %v434 = vpop.permute.xlu0 %433
    %v436 = vadd.f32 %v426, %v434
    %v437 = vtanh.pop %v436
    %439 = vrot.lane.b32.xlu0 %v437, 64
    %v440 = vpop.permute.xlu0 %439
    %v442 = vmul.f32 %v425, %v440
    %445 = vrot.lane.b32.xlu0 %v394, 64
    %v446 = vpop.permute.xlu0 %445
    %v448 = vsel %vm144, %v398, %v446
    %v450 = vsel %vm252, %v448, 0
    %452 = vmatpush.msra.mxu0 0.0
    %453 = vmatpush.msra.mxu0 0.0
    %454 = vmatpush.msra.mxu0 0.0
    %455 = vmatpush.msra.mxu0 0.0
    %456 = vmatpush.msra.mxu0 0.0
    %457 = vmatpush.msra.mxu0 0.0
    %458 = vmatpush.msra.mxu0 0.0
    %459 = vmatpush.msra.mxu0 0.0
    %460 = vmatpush.msra.mxu0 %v247
    %461 = vmatpush.msra.mxu0 %v246
    %462 = vmatpush.msra.mxu0 %v245
    %463 = vmatpush.msra.mxu0 %v244
    %464 = vmatpush.msra.mxu0 %v243
    %465 = vmatpush.msra.mxu0 %v242
    %466 = vmatpush.msra.mxu0 %v241
    %467 = vmatpush.msra.mxu0 %v240
    %468 = vmatmul.f32.gmra.mxu0 %v450
    %v469 = vpop.f32.mrf.mxu0
    %v470 = vadd.f32 %v250, %v469
    %471 = vdwg.mxu0
    %v472 = vtanh.pop %v470
    %v473 = vadd.f32 %v472, 1.0
    %v474 = vmul.f32 %v473, 0.5
    %v475 = vsel %vm138, %v472, %v474
    %v476 = vmul.f32 %v475, %v388
    %478 = vrot.lane.b32.xlu0 %v475, 64
    %v479 = vpop.permute.xlu0 %478
    %v481 = vmul.f32 %v475, %v479
    %483 = vrot.lane.b32.xlu0 %v481, 32
    %v484 = vpop.permute.xlu0 %483
    %v486 = vadd.f32 %v476, %v484
    %v487 = vtanh.pop %v486
    %489 = vrot.lane.b32.xlu0 %v487, 64
    %v490 = vpop.permute.xlu0 %489
    %v492 = vmul.f32 %v475, %v490
    %v493 = vld [vmem:[#allocation2 + $0x20] sm:$0xff]
    %495 = vrot.lane.b32.xlu0 %v442, 32
    %v496 = vpop.permute.xlu0 %495
    %v497 = vsel %vm144, %v496, 0
    %499 = vmatpush.msra.mxu0 0.0
    %500 = vmatpush.msra.mxu0 0.0
    %501 = vmatpush.msra.mxu0 0.0
    %502 = vmatpush.msra.mxu0 0.0
    %503 = vmatpush.msra.mxu0 0.0
    %504 = vmatpush.msra.mxu0 0.0
    %505 = vmatpush.msra.mxu0 0.0
    %506 = vmatpush.msra.mxu0 0.0
    %507 = vmatpush.msra.mxu0 0.0
    %508 = vmatpush.msra.mxu0 0.0
    %509 = vmatpush.msra.mxu0 0.0
    %510 = vmatpush.msra.mxu0 0.0
    %511 = vmatpush.msra.mxu0 %v143
    %512 = vmatpush.msra.mxu0 %v142
    %513 = vmatpush.msra.mxu0 %v141
    %514 = vmatpush.msra.mxu0 %v140
    %515 = vmatmul.f32.gmra.mxu0 %v497
    %v516 = vpop.f32.mrf.mxu0
    %v517 = vadd.f32 0.0, %v516
    %518 = vdwg.mxu0
    %v519 = vadd.f32 %v493, %v517
    %v520 = vtanh.pop %v519
    %v521 = vadd.f32 %v520, 1.0
    %v522 = vmul.f32 %v521, 0.5
    %v523 = vsel %vm138, %v520, %v522
    %v524 = vmul.f32 %v523, %v436
    %526 = vrot.lane.b32.xlu0 %v523, 64
    %v527 = vpop.permute.xlu0 %526
    %v529 = vmul.f32 %v523, %v527
    %531 = vrot.lane.b32.xlu0 %v529, 32
    %v532 = vpop.permute.xlu0 %531
    %v534 = vadd.f32 %v524, %v532
    %v535 = vtanh.pop %v534
    %537 = vrot.lane.b32.xlu0 %v535, 64
    %v538 = vpop.permute.xlu0 %537
    %v540 = vmul.f32 %v523, %v538
    %543 = vrot.lane.b32.xlu0 %v492, 64
    %v544 = vpop.permute.xlu0 %543
    %v546 = vsel %vm144, %v496, %v544
    %v548 = vsel %vm252, %v546, 0
    %550 = vmatpush.msra.mxu0 0.0
    %551 = vmatpush.msra.mxu0 0.0
    %552 = vmatpush.msra.mxu0 0.0
    %553 = vmatpush.msra.mxu0 0.0
    %554 = vmatpush.msra.mxu0 0.0
    %555 = vmatpush.msra.mxu0 0.0
    %556 = vmatpush.msra.mxu0 0.0
    %557 = vmatpush.msra.mxu0 0.0
    %558 = vmatpush.msra.mxu0 %v247
    %559 = vmatpush.msra.mxu0 %v246
    %560 = vmatpush.msra.mxu0 %v245
    %561 = vmatpush.msra.mxu0 %v244
    %562 = vmatpush.msra.mxu0 %v243
    %563 = vmatpush.msra.mxu0 %v242
    %564 = vmatpush.msra.mxu0 %v241
    %565 = vmatpush.msra.mxu0 %v240
    %566 = vmatmul.f32.gmra.mxu0 %v548
    %v567 = vpop.f32.mrf.mxu0
    %v568 = vadd.f32 %v250, %v567
    %569 = vdwg.mxu0
    %v570 = vtanh.pop %v568
    %v571 = vadd.f32 %v570, 1.0
    %v572 = vmul.f32 %v571, 0.5
    %v573 = vsel %vm138, %v570, %v572
    %v574 = vmul.f32 %v573, %v486
    %576 = vrot.lane.b32.xlu0 %v573, 64
    %v577 = vpop.permute.xlu0 %576
    %v579 = vmul.f32 %v573, %v577
    %581 = vrot.lane.b32.xlu0 %v579, 32
    %v582 = vpop.permute.xlu0 %581
    %v584 = vadd.f32 %v574, %v582
    %v585 = vtanh.pop %v584
    %587 = vrot.lane.b32.xlu0 %v585, 64
    %v588 = vpop.permute.xlu0 %587
    %v590 = vmul.f32 %v573, %v588
    %v591 = vld [vmem:[#allocation2 + $0x28] sm:$0xff]
    %593 = vrot.lane.b32.xlu0 %v540, 32
    %v594 = vpop.permute.xlu0 %593
    %v595 = vsel %vm144, %v594, 0
    %597 = vmatpush.msra.mxu0 0.0
    %598 = vmatpush.msra.mxu0 0.0
    %599 = vmatpush.msra.mxu0 0.0
    %600 = vmatpush.msra.mxu0 0.0
    %601 = vmatpush.msra.mxu0 0.0
    %602 = vmatpush.msra.mxu0 0.0
    %603 = vmatpush.msra.mxu0 0.0
    %604 = vmatpush.msra.mxu0 0.0
    %605 = vmatpush.msra.mxu0 0.0
    %606 = vmatpush.msra.mxu0 0.0
    %607 = vmatpush.msra.mxu0 0.0
    %608 = vmatpush.msra.mxu0 0.0
    %609 = vmatpush.msra.mxu0 %v143
    %610 = vmatpush.msra.mxu0 %v142
    %611 = vmatpush.msra.mxu0 %v141
    %612 = vmatpush.msra.mxu0 %v140
    %613 = vmatmul.f32.gmra.mxu0 %v595
    %v614 = vpop.f32.mrf.mxu0
    %v615 = vadd.f32 0.0, %v614
    %616 = vdwg.mxu0
    %v617 = vadd.f32 %v591, %v615
    %v618 = vtanh.pop %v617
    %v619 = vadd.f32 %v618, 1.0
    %v620 = vmul.f32 %v619, 0.5
    %v621 = vsel %vm138, %v618, %v620
    %v622 = vmul.f32 %v621, %v534
    %624 = vrot.lane.b32.xlu0 %v621, 64
    %v625 = vpop.permute.xlu0 %624
    %v627 = vmul.f32 %v621, %v625
    %629 = vrot.lane.b32.xlu0 %v627, 32
    %v630 = vpop.permute.xlu0 %629
    %v632 = vadd.f32 %v622, %v630
    %v633 = vtanh.pop %v632
    %635 = vrot.lane.b32.xlu0 %v633, 64
    %v636 = vpop.permute.xlu0 %635
    %v638 = vmul.f32 %v621, %v636
    %641 = vrot.lane.b32.xlu0 %v590, 64
    %v642 = vpop.permute.xlu0 %641
    %v644 = vsel %vm144, %v594, %v642
    %v646 = vsel %vm252, %v644, 0
    %648 = vmatpush.msra.mxu0 0.0
    %649 = vmatpush.msra.mxu0 0.0
    %650 = vmatpush.msra.mxu0 0.0
    %651 = vmatpush.msra.mxu0 0.0
    %652 = vmatpush.msra.mxu0 0.0
    %653 = vmatpush.msra.mxu0 0.0
    %654 = vmatpush.msra.mxu0 0.0
    %655 = vmatpush.msra.mxu0 0.0
    %656 = vmatpush.msra.mxu0 %v247
    %657 = vmatpush.msra.mxu0 %v246
    %658 = vmatpush.msra.mxu0 %v245
    %659 = vmatpush.msra.mxu0 %v244
    %660 = vmatpush.msra.mxu0 %v243
    %661 = vmatpush.msra.mxu0 %v242
    %662 = vmatpush.msra.mxu0 %v241
    %663 = vmatpush.msra.mxu0 %v240
    %664 = vmatmul.f32.gmra.mxu0 %v646
    %v665 = vpop.f32.mrf.mxu0
    %v666 = vadd.f32 %v250, %v665
    %667 = vdwg.mxu0
    %v668 = vtanh.pop %v666
    %v669 = vadd.f32 %v668, 1.0
    %v670 = vmul.f32 %v669, 0.5
    %v671 = vsel %vm138, %v668, %v670
    %v672 = vmul.f32 %v671, %v584
    %674 = vrot.lane.b32.xlu0 %v671, 64
    %v675 = vpop.permute.xlu0 %674
    %v677 = vmul.f32 %v671, %v675
    %679 = vrot.lane.b32.xlu0 %v677, 32
    %v680 = vpop.permute.xlu0 %679
    %v682 = vadd.f32 %v672, %v680
    %v683 = vtanh.pop %v682
    %685 = vrot.lane.b32.xlu0 %v683, 64
    %v686 = vpop.permute.xlu0 %685
    %v688 = vmul.f32 %v671, %v686
    %v689 = vld [vmem:[#allocation2 + $0x30] sm:$0xff]
    %691 = vrot.lane.b32.xlu0 %v638, 32
    %v692 = vpop.permute.xlu0 %691
    %v693 = vsel %vm144, %v692, 0
    %695 = vmatpush.msra.mxu0 0.0
    %696 = vmatpush.msra.mxu0 0.0
    %697 = vmatpush.msra.mxu0 0.0
    %698 = vmatpush.msra.mxu0 0.0
    %699 = vmatpush.msra.mxu0 0.0
    %700 = vmatpush.msra.mxu0 0.0
    %701 = vmatpush.msra.mxu0 0.0
    %702 = vmatpush.msra.mxu0 0.0
    %703 = vmatpush.msra.mxu0 0.0
    %704 = vmatpush.msra.mxu0 0.0
    %705 = vmatpush.msra.mxu0 0.0
    %706 = vmatpush.msra.mxu0 0.0
    %707 = vmatpush.msra.mxu0 %v143
    %708 = vmatpush.msra.mxu0 %v142
    %709 = vmatpush.msra.mxu0 %v141
    %710 = vmatpush.msra.mxu0 %v140
    %711 = vmatmul.f32.gmra.mxu0 %v693
    %v712 = vpop.f32.mrf.mxu0
    %v713 = vadd.f32 0.0, %v712
    %714 = vdwg.mxu0
    %v715 = vadd.f32 %v689, %v713
    %v716 = vtanh.pop %v715
    %v717 = vadd.f32 %v716, 1.0
    %v718 = vmul.f32 %v717, 0.5
    %v719 = vsel %vm138, %v716, %v718
    %v720 = vmul.f32 %v719, %v632
    %722 = vrot.lane.b32.xlu0 %v719, 64
    %v723 = vpop.permute.xlu0 %722
    %v725 = vmul.f32 %v719, %v723
    %727 = vrot.lane.b32.xlu0 %v725, 32
    %v728 = vpop.permute.xlu0 %727
    %v730 = vadd.f32 %v720, %v728
    %v731 = vtanh.pop %v730
    %733 = vrot.lane.b32.xlu0 %v731, 64
    %v734 = vpop.permute.xlu0 %733
    %v736 = vmul.f32 %v719, %v734
    %739 = vrot.lane.b32.xlu0 %v688, 64
    %v740 = vpop.permute.xlu0 %739
    %v742 = vsel %vm144, %v692, %v740
    %v744 = vsel %vm252, %v742, 0
    %746 = vmatpush.msra.mxu0 0.0
    %747 = vmatpush.msra.mxu0 0.0
    %748 = vmatpush.msra.mxu0 0.0
    %749 = vmatpush.msra.mxu0 0.0
    %750 = vmatpush.msra.mxu0 0.0
    %751 = vmatpush.msra.mxu0 0.0
    %752 = vmatpush.msra.mxu0 0.0
    %753 = vmatpush.msra.mxu0 0.0
    %754 = vmatpush.msra.mxu0 %v247
    %755 = vmatpush.msra.mxu0 %v246
    %756 = vmatpush.msra.mxu0 %v245
    %757 = vmatpush.msra.mxu0 %v244
    %758 = vmatpush.msra.mxu0 %v243
    %759 = vmatpush.msra.mxu0 %v242
    %760 = vmatpush.msra.mxu0 %v241
    %761 = vmatpush.msra.mxu0 %v240
    %762 = vmatmul.f32.gmra.mxu0 %v744
    %v763 = vpop.f32.mrf.mxu0
    %v764 = vadd.f32 %v250, %v763
    %765 = vdwg.mxu0
    %v766 = vtanh.pop %v764
    %v767 = vadd.f32 %v766, 1.0
    %v768 = vmul.f32 %v767, 0.5
    %v769 = vsel %vm138, %v766, %v768
    %v770 = vmul.f32 %v769, %v682
    %772 = vrot.lane.b32.xlu0 %v769, 64
    %v773 = vpop.permute.xlu0 %772
    %v775 = vmul.f32 %v769, %v773
    %777 = vrot.lane.b32.xlu0 %v775, 32
    %v778 = vpop.permute.xlu0 %777
    %v780 = vadd.f32 %v770, %v778
    %v781 = vtanh.pop %v780
    %783 = vrot.lane.b32.xlu0 %v781, 64
    %v784 = vpop.permute.xlu0 %783
    %v786 = vmul.f32 %v769, %v784
    %v787 = vld [vmem:[#allocation2 + $0x38] sm:$0xff]
    %789 = vrot.lane.b32.xlu0 %v736, 32
    %v790 = vpop.permute.xlu0 %789
    %v791 = vsel %vm144, %v790, 0
    %793 = vmatpush.msra.mxu0 0.0
    %794 = vmatpush.msra.mxu0 0.0
    %795 = vmatpush.msra.mxu0 0.0
    %796 = vmatpush.msra.mxu0 0.0
    %797 = vmatpush.msra.mxu0 0.0
    %798 = vmatpush.msra.mxu0 0.0
    %799 = vmatpush.msra.mxu0 0.0
    %800 = vmatpush.msra.mxu0 0.0
    %801 = vmatpush.msra.mxu0 0.0
    %802 = vmatpush.msra.mxu0 0.0
    %803 = vmatpush.msra.mxu0 0.0
    %804 = vmatpush.msra.mxu0 0.0
    %805 = vmatpush.msra.mxu0 %v143
    %806 = vmatpush.msra.mxu0 %v142
    %807 = vmatpush.msra.mxu0 %v141
    %808 = vmatpush.msra.mxu0 %v140
    %809 = vmatmul.f32.gmra.mxu0 %v791
    %v810 = vpop.f32.mrf.mxu0
    %v811 = vadd.f32 0.0, %v810
    %812 = vdwg.mxu0
    %v813 = vadd.f32 %v787, %v811
    %v814 = vtanh.pop %v813
    %v815 = vadd.f32 %v814, 1.0
    %v816 = vmul.f32 %v815, 0.5
    %v817 = vsel %vm138, %v814, %v816
    %v818 = vmul.f32 %v817, %v730
    %820 = vrot.lane.b32.xlu0 %v817, 64
    %v821 = vpop.permute.xlu0 %820
    %v823 = vmul.f32 %v817, %v821
    %825 = vrot.lane.b32.xlu0 %v823, 32
    %v826 = vpop.permute.xlu0 %825
    %v828 = vadd.f32 %v818, %v826
    %v829 = vtanh.pop %v828
    %831 = vrot.lane.b32.xlu0 %v829, 64
    %v832 = vpop.permute.xlu0 %831
    %v834 = vmul.f32 %v817, %v832
    %837 = vrot.lane.b32.xlu0 %v786, 64
    %v838 = vpop.permute.xlu0 %837
    %v840 = vsel %vm144, %v790, %v838
    %v842 = vsel %vm252, %v840, 0
    %844 = vmatpush.msra.mxu0 0.0
    %845 = vmatpush.msra.mxu0 0.0
    %846 = vmatpush.msra.mxu0 0.0
    %847 = vmatpush.msra.mxu0 0.0
    %848 = vmatpush.msra.mxu0 0.0
    %849 = vmatpush.msra.mxu0 0.0
    %850 = vmatpush.msra.mxu0 0.0
    %851 = vmatpush.msra.mxu0 0.0
    %852 = vmatpush.msra.mxu0 %v247
    %853 = vmatpush.msra.mxu0 %v246
    %854 = vmatpush.msra.mxu0 %v245
    %855 = vmatpush.msra.mxu0 %v244
    %856 = vmatpush.msra.mxu0 %v243
    %857 = vmatpush.msra.mxu0 %v242
    %858 = vmatpush.msra.mxu0 %v241
    %859 = vmatpush.msra.mxu0 %v240
    %860 = vmatmul.f32.gmra.mxu0 %v842
    %v861 = vpop.f32.mrf.mxu0
    %v862 = vadd.f32 %v250, %v861
    %863 = vdwg.mxu0
    %v864 = vtanh.pop %v862
    %v865 = vadd.f32 %v864, 1.0
    %v866 = vmul.f32 %v865, 0.5
    %v867 = vsel %vm138, %v864, %v866
    %v868 = vmul.f32 %v867, %v780
    %870 = vrot.lane.b32.xlu0 %v867, 64
    %v871 = vpop.permute.xlu0 %870
    %v873 = vmul.f32 %v867, %v871
    %875 = vrot.lane.b32.xlu0 %v873, 32
    %v876 = vpop.permute.xlu0 %875
    %v878 = vadd.f32 %v868, %v876
    %v879 = vtanh.pop %v878
    %881 = vrot.lane.b32.xlu0 %v879, 64
    %v882 = vpop.permute.xlu0 %881
    %v884 = vmul.f32 %v867, %v882
    %886 = vrot.lane.b32.xlu0 %v834, 32
    %v887 = vpop.permute.xlu0 %886
    %890 = vrot.lane.b32.xlu0 %v884, 64
    %v891 = vpop.permute.xlu0 %890
    %v893 = vsel %vm144, %v887, %v891
    %v895 = vsel %vm252, %v893, 0
    %897 = vmatpush.msra.mxu0 0.0
    %898 = vmatpush.msra.mxu0 0.0
    %899 = vmatpush.msra.mxu0 0.0
    %900 = vmatpush.msra.mxu0 0.0
    %901 = vmatpush.msra.mxu0 0.0
    %902 = vmatpush.msra.mxu0 0.0
    %903 = vmatpush.msra.mxu0 0.0
    %904 = vmatpush.msra.mxu0 0.0
    %905 = vmatpush.msra.mxu0 %v247
    %906 = vmatpush.msra.mxu0 %v246
    %907 = vmatpush.msra.mxu0 %v245
    %908 = vmatpush.msra.mxu0 %v244
    %909 = vmatpush.msra.mxu0 %v243
    %910 = vmatpush.msra.mxu0 %v242
    %911 = vmatpush.msra.mxu0 %v241
    %912 = vmatpush.msra.mxu0 %v240
    %913 = vmatmul.f32.gmra.mxu0 %v895
    %v914 = vpop.f32.mrf.mxu0
    %v915 = vadd.f32 %v250, %v914
    %916 = vdwg.mxu0
    %v917 = vtanh.pop %v915
    %v918 = vadd.f32 %v917, 1.0
    %v919 = vmul.f32 %v918, 0.5
    %v920 = vsel %vm138, %v917, %v919
    %v921 = vmul.f32 %v920, %v878
    %923 = vrot.lane.b32.xlu0 %v920, 64
    %v924 = vpop.permute.xlu0 %923
    %v926 = vmul.f32 %v920, %v924
    %928 = vrot.lane.b32.xlu0 %v926, 32
    %v929 = vpop.permute.xlu0 %928
    %v931 = vadd.f32 %v921, %v929
    %v932 = vtanh.pop %v931
    %934 = vrot.lane.b32.xlu0 %v932, 64
    %v935 = vpop.permute.xlu0 %934
    %v937 = vmul.f32 %v920, %v935
    %v938 = vld [vmem:[%s6] sm:$0x1]
    %v940 = vperm.slane %v938, 0
    %941 = vrot.lane.b32.xlu0 %v940, 96
    %v942 = vpop.permute.xlu0 %941
    %v944 = vmul.f32 %v937, %v942
    %946 = vrot.lane.b32.xlu0 %v944, 32
    %v947 = vpop.permute.xlu0 %946
    %v949 = vsel %vm144, %v947, 0.0
    %950 = vadd.xlane.f32.xlu0 %v949
    %v951 = vpop.xlane.xlu0 %950
    %s952 = sld [smem:[#allocation3]]
    %v953 = vstv %s952
    %v954 = vadd.f32 %v951, %v953
    %v955 = vmul.f32 %v954, 0.5
    %v956 = vtanh.pop %v955
    %v957 = vadd.f32 %v956, 1.0
    %v958 = vmul.f32 %v957, 0.5
    %vm959 = vcmask 7168
    %960 = vst.msk [vmem:[%s8] sm:$0xff] %vm959, %v958
    // Predicated region
    $region38: #{tpu_custom_call.1} parent=1 // pred_check
      _
    $region39: #{tpu_custom_call.1} parent=1 // pred_check_branch
      %962 = sbr.rel (0) target = $region41
    $region40: #{tpu_custom_call.1} parent=1 // pred_region
      _
    $region41: #{tpu_custom_call.1} parent=1 // pred_fallthru
      _
    // Predicated region
    $region42: #{tpu_custom_call.1} parent=1 // pred_check
      _
    $region43: #{tpu_custom_call.1} parent=1 // pred_check_branch
      %964 = sbr.rel (0) target = $region45
    $region44: #{tpu_custom_call.1} parent=1 // pred_region
      _
    $region45: #{tpu_custom_call.1} parent=1 // pred_fallthru
      _
    %965 = vsyncpa [#allocation5], 1

</llo_original>
